<compile_context>
chip_gen: v6e
topology: v6e:2x2x1
jax: 0.10.0
libtpu: 0.0.40
codegen_flags: <defaults>
</compile_context>

<pallas_src>
import math

import jax
import jax.numpy as jnp
from jax.experimental import pallas as pl
from jax.experimental.pallas import tpu as pltpu


def _round_up(x, m):
    return ((x + m - 1) // m) * m


def _largest_tile(n_pad, cap):
    """Largest multiple of 128 that divides n_pad and is <= cap (at least 128)."""
    best = 128
    t = 128
    cap = min(cap, n_pad)
    while t <= cap:
        if n_pad % t == 0:
            best = t
        t += 128
    return best


# ---------------------------------------------------------------------------
# Fused kernel: out = adj @ (x @ W) + bias, tiled over (row tile i, reduction
# tile k), f32 VMEM accumulator with pl.when init/finalize.
# ---------------------------------------------------------------------------
def _gcn_kernel(adj_ref, x_ref, w_ref, b_ref, out_ref, acc_ref):
    k = pl.program_id(1)

    @pl.when(k == 0)
    def _():
        acc_ref[...] = jnp.zeros_like(acc_ref)

    # support slab for this reduction tile: (tk, F_out_pad). Recomputed per row
    # tile; pure MXU work, free in this memory-bound regime.
    support = jnp.dot(
        x_ref[...], w_ref[...], preferred_element_type=jnp.float32
    ).astype(jnp.bfloat16)

    # adj streamed f32 from HBM (no wrapper pre-pass); cast to bf16 in-kernel
    # for native MXU rate, accumulate in f32.
    acc_ref[...] += jnp.dot(
        adj_ref[...].astype(jnp.bfloat16), support,
        preferred_element_type=jnp.float32,
    )

    @pl.when(k == pl.num_programs(1) - 1)
    def _():
        out_ref[...] = acc_ref[...] + b_ref[...]


@jax.jit
def graph_convolution(x, adj, weight, bias=None):
    """GCN layer forward: adj @ (x @ weight) + bias via a fused Pallas TPU kernel."""
    n, f_in = x.shape
    f_out = weight.shape[1]

    n_pad = _round_up(n, 128)
    f_out_pad = _round_up(f_out, 128)  # lane-dense (unmasked) output stores

    # --- tile selection ------------------------------------------------------
    # Caps sized for the smallest-VMEM generation (v7x, 64 MiB physical /
    # 32 MiB default scoped). tm capped near n_pad/2 so the parallel row axis
    # splits across 2 TensorCores when possible.
    if n_pad >= 256:
        tm_cap = min(512, max(128, (n_pad // 2) // 128 * 128))
    else:
        tm_cap = 128
    tk_cap = min(2048, n_pad)
    budget = 24 * 1024 * 1024  # double-buffered f32 adj tile + bf16 x tile
    while tk_cap > 128 and (2 * tm_cap * tk_cap * 4 + 2 * tk_cap * f_in * 2) > budget:
        tk_cap //= 2
    tm = _largest_tile(n_pad, tm_cap)   # divides n_pad -> row grid covers all rows
    tk = _largest_tile(n_pad, tk_cap)   # divides n_pad -> reduction covers all cols

    # --- pad / cast small operands (adj stays f32, no pre-pass when N%128==0) -
    x_b = x.astype(jnp.bfloat16)
    adj_f = adj.astype(jnp.float32)
    if n_pad != n:
        x_b = jnp.pad(x_b, ((0, n_pad - n), (0, 0)))
        adj_f = jnp.pad(adj_f, ((0, n_pad - n), (0, n_pad - n)))
    w_b = weight.astype(jnp.bfloat16)
    if f_out_pad != f_out:
        w_b = jnp.pad(w_b, ((0, 0), (0, f_out_pad - f_out)))
    if bias is None:
        b_p = jnp.zeros((1, f_out_pad), jnp.float32)
    else:
        b_p = jnp.pad(bias.astype(jnp.float32), (0, f_out_pad - f_out)).reshape(
            1, f_out_pad
        )

    out_pad = pl.pallas_call(
        _gcn_kernel,
        out_shape=jax.ShapeDtypeStruct((n_pad, f_out_pad), jnp.float32),
        grid_spec=pltpu.PrefetchScalarGridSpec(
            num_scalar_prefetch=0,
            grid=(n_pad // tm, n_pad // tk),
            in_specs=[
                # adj tile, f32, streamed
                pl.BlockSpec((tm, tk), lambda i, k: (i, k)),
                # x tile for on-the-fly support compute
                pl.BlockSpec((tk, f_in), lambda i, k: (k, 0)),
                # weight: constant index -> DMA'd once, resident in VMEM
                pl.BlockSpec((f_in, f_out_pad), lambda i, k: (0, 0)),
                # bias: resident
                pl.BlockSpec((1, f_out_pad), lambda i, k: (0, 0)),
            ],
            out_specs=pl.BlockSpec((tm, f_out_pad), lambda i, k: (i, 0)),
            scratch_shapes=[pltpu.VMEM((tm, f_out_pad), jnp.float32)],
        ),
        compiler_params=pltpu.CompilerParams(
            dimension_semantics=("parallel", "arbitrary"),
            vmem_limit_bytes=32 * 1024 * 1024,
        ),
    )(adj_f, x_b, w_b, b_p)

    return out_pad[:n, :f_out].astype(x.dtype)


def init_params(key, in_features, out_features):
    """Deterministic reproduction of GraphConvolution.reset_parameters()."""
    stdv = 1.0 / math.sqrt(out_features)
    kw, kb = jax.random.split(key)
    weight = jax.random.uniform(
        kw, (in_features, out_features), jnp.float32, minval=-stdv, maxval=stdv
    )
    bias = jax.random.uniform(
        kb, (out_features,), jnp.float32, minval=-stdv, maxval=stdv
    )
    return weight, bias


if __name__ == "__main__":
    key = jax.random.PRNGKey(0)
    k_x, k_adj, k_params = jax.random.split(key, 3)

    N = 640            # exercises row tiling, N -> 768 padding, 2-tile parallel axis
    IN_FEATURES = 64
    OUT_FEATURES = 32  # exercises F_out -> 128 lane padding

    # Node features.
    x = jax.random.normal(k_x, (N, IN_FEATURES), jnp.float32)

    # Symmetric-normalized adjacency with self loops (dense), like pygcn preprocessing.
    a = (jax.random.uniform(k_adj, (N, N)) < 0.05).astype(jnp.float32)
    a = jnp.maximum(a, a.T) + jnp.eye(N, dtype=jnp.float32)
    deg = jnp.sum(a, axis=1)
    d_inv_sqrt = 1.0 / jnp.sqrt(deg)
    adj = a * d_inv_sqrt[:, None] * d_inv_sqrt[None, :]

    weight, bias = init_params(k_params, IN_FEATURES, OUT_FEATURES)

    out = graph_convolution(x, adj, weight, bias)
    out = jax.block_until_ready(out)

    # Pure-JAX f32 reference. Kernel uses bf16 inputs with f32 accumulation, so
    # tolerance is loosened to the bf16 input-rounding level.
    ref = adj @ (x @ weight) + bias[None, :]
    assert out.shape == (N, OUT_FEATURES)
    assert jnp.allclose(out, ref, atol=5e-2, rtol=5e-2), "mismatch vs reference"

    print("KERNEL_OK")
</pallas_src>

<mosaic_0001>
module attributes {stable_mosaic.version = 11 : i64} {
  func.func @_gcn_kernel(%arg0: i32, %arg1: i32, %arg2: memref<128x640xf32, #tpu.memory_space<vmem>>, %arg3: memref<640x64xbf16, #tpu.memory_space<vmem>>, %arg4: memref<64x128xbf16, #tpu.memory_space<vmem>>, %arg5: memref<1x128xf32, #tpu.memory_space<vmem>>, %arg6: memref<128x128xf32, #tpu.memory_space<vmem>>, %arg7: memref<128x128xf32, #tpu.memory_space<vmem>>) attributes {dimension_semantics = [#tpu.dimension_semantics<parallel>, #tpu.dimension_semantics<arbitrary>], iteration_bounds = array<i64: 5, 1>, scalar_prefetch = 0 : i64, scratch_operands = 1 : i64, tpu.core_type = #tpu.core_type<tc>, window_params = [{transform_indices = @transform_0, window_bounds = array<i64: 128, 640>}, {transform_indices = @transform_1, window_bounds = array<i64: 640, 64>}, {pipeline_mode = #tpu.pipeline_mode<synchronous>, transform_indices = @transform_2, window_bounds = array<i64: 64, 128>}, {pipeline_mode = #tpu.pipeline_mode<synchronous>, transform_indices = @transform_3, window_bounds = array<i64: 1, 128>}, {transform_indices = @transform_4, window_bounds = array<i64: 128, 128>}]} {
    %c0_i32 = arith.constant 0 : i32
    %0 = arith.cmpi eq, %arg1, %c0_i32 : i32
    %1 = arith.extui %0 : i1 to i32
    %c0_i32_0 = arith.constant 0 : i32
    %2 = arith.cmpi ne, %1, %c0_i32_0 : i32
    scf.if %2 {
      %cst_13 = arith.constant 0.000000e+00 : f32
      %16 = vector.broadcast %cst_13 : f32 to vector<128x128xf32>
      %c0_14 = arith.constant 0 : index
      %c0_15 = arith.constant 0 : index
      %17 = vector.load %arg7[%c0_14, %c0_15] : memref<128x128xf32, #tpu.memory_space<vmem>>, vector<128x128xf32>
      tpu.vector_store %arg7[%c0_14, %c0_15], %16 {strides = array<i32>} : memref<128x128xf32, #tpu.memory_space<vmem>>, vector<128x128xf32>,
    } else {
    }
    %c0 = arith.constant 0 : index
    %c0_1 = arith.constant 0 : index
    %3 = vector.load %arg3[%c0, %c0_1] : memref<640x64xbf16, #tpu.memory_space<vmem>>, vector<640x64xbf16>
    %c0_2 = arith.constant 0 : index
    %c0_3 = arith.constant 0 : index
    %4 = vector.load %arg4[%c0_2, %c0_3] : memref<64x128xbf16, #tpu.memory_space<vmem>>, vector<64x128xbf16>
    %cst = arith.constant dense<0.000000e+00> : vector<640x128xf32>
    %5 = tpu.matmul %3, %4, %cst {dimension_numbers = #tpu.dot_dimension_numbers<[1], [0], [0], [1], [0, 0, 1, 1], [], []>} : vector<640x64xbf16>, vector<64x128xbf16>, vector<640x128xf32> -> vector<640x128xf32>
    %6 = arith.truncf %5 : vector<640x128xf32> to vector<640x128xbf16>
    %c0_4 = arith.constant 0 : index
    %c0_5 = arith.constant 0 : index
    %7 = vector.load %arg7[%c0_4, %c0_5] : memref<128x128xf32, #tpu.memory_space<vmem>>, vector<128x128xf32>
    %c0_6 = arith.constant 0 : index
    %c0_7 = arith.constant 0 : index
    %8 = vector.load %arg2[%c0_6, %c0_7] : memref<128x640xf32, #tpu.memory_space<vmem>>, vector<128x640xf32>
    %9 = arith.truncf %8 : vector<128x640xf32> to vector<128x640xbf16>
    %cst_8 = arith.constant dense<0.000000e+00> : vector<128x128xf32>
    %10 = tpu.matmul %9, %6, %cst_8 {dimension_numbers = #tpu.dot_dimension_numbers<[1], [0], [0], [1], [0, 0, 1, 1], [], []>} : vector<128x640xbf16>, vector<640x128xbf16>, vector<128x128xf32> -> vector<128x128xf32>
    %11 = arith.addf %7, %10 : vector<128x128xf32>
    %c0_9 = arith.constant 0 : index
    %c0_10 = arith.constant 0 : index
    %12 = vector.load %arg7[%c0_9, %c0_10] : memref<128x128xf32, #tpu.memory_space<vmem>>, vector<128x128xf32>
    tpu.vector_store %arg7[%c0_9, %c0_10], %11 {strides = array<i32>} : memref<128x128xf32, #tpu.memory_space<vmem>>, vector<128x128xf32>,
    %c0_i32_11 = arith.constant 0 : i32
    %13 = arith.cmpi eq, %arg1, %c0_i32_11 : i32
    %14 = arith.extui %13 : i1 to i32
    %c0_i32_12 = arith.constant 0 : i32
    %15 = arith.cmpi ne, %14, %c0_i32_12 : i32
    scf.if %15 {
      %c0_13 = arith.constant 0 : index
      %c0_14 = arith.constant 0 : index
      %16 = vector.load %arg7[%c0_13, %c0_14] : memref<128x128xf32, #tpu.memory_space<vmem>>, vector<128x128xf32>
      %c0_15 = arith.constant 0 : index
      %c0_16 = arith.constant 0 : index
      %17 = vector.load %arg5[%c0_15, %c0_16] : memref<1x128xf32, #tpu.memory_space<vmem>>, vector<1x128xf32>
      %18 = vector.broadcast %17 : vector<1x128xf32> to vector<128x128xf32>
      %19 = arith.addf %16, %18 : vector<128x128xf32>
      %c0_17 = arith.constant 0 : index
      %c0_18 = arith.constant 0 : index
      %20 = vector.load %arg6[%c0_17, %c0_18] : memref<128x128xf32, #tpu.memory_space<vmem>>, vector<128x128xf32>
      tpu.vector_store %arg6[%c0_17, %c0_18], %19 {strides = array<i32>} : memref<128x128xf32, #tpu.memory_space<vmem>>, vector<128x128xf32>,
    } else {
    }
    return
  }
  func.func @transform_0(%arg0: i32, %arg1: i32) -> (i32, i32) {
    %c0_i32 = arith.constant 0 : i32
    return %arg0, %arg1 : i32, i32
  }
  func.func @transform_1(%arg0: i32, %arg1: i32) -> (i32, i32) {
    %c0_i32 = arith.constant 0 : i32
    %c0_i32_0 = arith.constant 0 : i32
    return %arg1, %c0_i32 : i32, i32
  }
  func.func @transform_2(%arg0: i32, %arg1: i32) -> (i32, i32) {
    %c0_i32 = arith.constant 0 : i32
    %c0_i32_0 = arith.constant 0 : i32
    %c0_i32_1 = arith.constant 0 : i32
    return %c0_i32, %c0_i32_0 : i32, i32
  }
  func.func @transform_3(%arg0: i32, %arg1: i32) -> (i32, i32) {
    %c0_i32 = arith.constant 0 : i32
    %c0_i32_0 = arith.constant 0 : i32
    %c0_i32_1 = arith.constant 0 : i32
    return %c0_i32, %c0_i32_0 : i32, i32
  }
  func.func @transform_4(%arg0: i32, %arg1: i32) -> (i32, i32) {
    %c0_i32 = arith.constant 0 : i32
    %c0_i32_0 = arith.constant 0 : i32
    return %arg0, %c0_i32 : i32, i32
  }
}

</mosaic_0001>

<llo_original>
// kernel: graph_convolution.1
$region0: #{graph_convolution.1}
  #allocation0 [shape = 'u32[]', space=smem, size = 0x4, offset = 0x4, fixed_abs, tag = 'smem constant byte address 0x4 - core index']
  #allocation1 [shape = 'u32[144,128]{1,0:T(1,128)}', space=vmem, size = 0x12000, scoped, tag = 'internal scratch']
  #allocation2 [shape = 'f32[128,128]{1,0:T(8,128)}', space=vmem, size = 0x10000, scoped, tag = 'scratch operand']
  %s0 = inlined_call_operand.hbm [shape: f32[640,640], index: 0, kind: input, shape index: {}]
  %s1 = inlined_call_operand.vmem [shape: bf16[640,64], index: 1, kind: input, shape index: {}]
  %s2 = inlined_call_operand.vmem [shape: bf16[64,128], index: 2, kind: input, shape index: {}]
  %s3 = inlined_call_operand.vmem [shape: f32[1,128], index: 3, kind: input, shape index: {}]
  %s4 = inlined_call_operand.vmem [shape: f32[640,128], index: 4, kind: output, shape index: {}]
  %s5 = sld [smem:[#allocation0]]
  $region61: #{graph_convolution.1} parent=0
    _
  %s7 = ssub.s32 1, %s5
  %s8 = scalar_select 0, %s7, %s5
  $region1: #{graph_convolution.1} parent=0
    #allocation3 [shape = 'u8[655360]{0}', space=vmem, size = 0xa0000, scoped, tag = 'input window, operand 0']
    #allocation4 [shape = 's32[2]{0}', space=sflag, size = 0x8, scoped, tag = 'scoped memory for graph_convolution.1']
    %9 = vsyncpa [#allocation4], 0
    %s10 = scalar_lea.sflag [#allocation4], 1
    %11 = vsyncpa %s10, 0
    loop: start=0, step=1, limit=7
    $region2: #{graph_convolution.1} parent=1 // loop_pre_header
      _
    $region3: #{graph_convolution.1} parent=1 // loop_header
      %s13 = sphi 0, %s17
      %p14 = scmp.ge.s32.totalorder %s13, 7
      %s20 = sphi 0, %s32
      %s21 = sphi 0, %s28
      %s22 = sphi 0, %s20
      %s23 = sphi 0, %s21
      %s24 = sphi 0, %s22
      %s25 = sphi 0, %s23
      %s37 = sphi 0, %s39
      %s40 = sphi 0, %s37
      %s41 = sphi 0, %s40
      %s57 = sphi 0, %s41
      %s63 = sphi 0, %s65
      %s66 = sphi 0, %s63
      %s67 = sphi 0, %s66
      %s83 = sphi 0, %s67
      %s87 = sphi 0, %s87
      %s89 = sphi 0, %s87
      %s90 = sphi 0, %s89
      %s104 = sphi 0, %s90
      %s108 = sphi 0, %s108
      %s110 = sphi 0, %s108
      %s111 = sphi 0, %s110
      %s125 = sphi 0, %s111
      %s131 = sphi 0, %s133
      %s134 = sphi 0, %s131
      %s135 = sphi 0, %s134
      %s151 = sphi 0, %s135
    $region4: #{graph_convolution.1} parent=1 // loop_header_branch
      %16 = sbr.rel (%p14) target = $region8
    $region5: #{graph_convolution.1} parent=1 // loop_body
      %s18 = ssub.s32 %s13, 1
      %s19 = ssub.s32 %s13, 2
      %s26 = sadd.s32 1, %s21
      %p27 = scmp.ge.s32.totalorder %s26, 1
      %s28 = scalar_select %p27, 0, %s26
      %s29 = sadd.s32 1, %s20
      %s30 = scalar_select %p27, %s29, %s20
      %p31 = scmp.ge.s32.totalorder %s30, 5
      %s32 = scalar_select %p31, 0, %s30
      %s33 = ssub.s32 %s20, %s32
      %s34 = ssub.s32 %s21, %s28
      %s35 = sor.u32 %s33, %s34
      %p36 = scmp.eq.s32.totalorder %s35, 0
      %s38 = sadd.s32 %s37, 1
      %s39 = scalar_select %p36, %s37, %s38
      %p42 = pneg %p36
      %p43 = scmp.eq.s32.totalorder %s13, 4
      %p44 = por %p42, %p43
      %p45 = scmp.ne.s32.totalorder %s37, %s40
      %p46 = scmp.eq.s32.totalorder %s13, 0
      %p47 = por %p45, %p46
      %p48 = scmp.ne.s32.totalorder %s37, %s40
      %p49 = scmp.eq.s32.totalorder %s18, 4
      %p50 = por %p48, %p49
      %p51 = scmp.ne.s32.totalorder %s40, %s41
      %p52 = scmp.eq.s32.totalorder %s18, 0
      %p53 = por %p51, %p52
      %p54 = scmp.ne.s32.totalorder %s40, %s41
      %p55 = scmp.eq.s32.totalorder %s19, 4
      %p56 = por %p54, %p55
      %p58 = scmp.ne.s32.totalorder %s41, %s57
      %p59 = scmp.eq.s32.totalorder %s19, 0
      %p60 = por %p58, %p59
      %s61 = ssub.s32 %s21, %s28
      %p62 = scmp.eq.s32.totalorder %s61, 0
      %s64 = sadd.s32 %s63, 1
      %s65 = scalar_select %p62, %s63, %s64
      %p68 = pneg %p62
      %p69 = scmp.eq.s32.totalorder %s13, 4
      %p70 = por %p68, %p69
      %p71 = scmp.ne.s32.totalorder %s63, %s66
      %p72 = scmp.eq.s32.totalorder %s13, 0
      %p73 = por %p71, %p72
      %p74 = scmp.ne.s32.totalorder %s63, %s66
      %p75 = scmp.eq.s32.totalorder %s18, 4
      %p76 = por %p74, %p75
      %p77 = scmp.ne.s32.totalorder %s66, %s67
      %p78 = scmp.eq.s32.totalorder %s18, 0
      %p79 = por %p77, %p78
      %p80 = scmp.ne.s32.totalorder %s66, %s67
      %p81 = scmp.eq.s32.totalorder %s19, 4
      %p82 = por %p80, %p81
      %p84 = scmp.ne.s32.totalorder %s67, %s83
      %p85 = scmp.eq.s32.totalorder %s19, 0
      %p86 = por %p84, %p85
      %s88 = sadd.s32 %s87, 1
      %p91 = scmp.eq.s32.totalorder %s13, 4
      %p92 = scmp.ne.s32.totalorder %s87, %s89
      %p93 = scmp.eq.s32.totalorder %s13, 0
      %p94 = por %p92, %p93
      %p95 = scmp.ne.s32.totalorder %s87, %s89
      %p96 = scmp.eq.s32.totalorder %s18, 4
      %p97 = por %p95, %p96
      %p98 = scmp.ne.s32.totalorder %s89, %s90
      %p99 = scmp.eq.s32.totalorder %s18, 0
      %p100 = por %p98, %p99
      %p101 = scmp.ne.s32.totalorder %s89, %s90
      %p102 = scmp.eq.s32.totalorder %s19, 4
      %p103 = por %p101, %p102
      %p105 = scmp.ne.s32.totalorder %s90, %s104
      %p106 = scmp.eq.s32.totalorder %s19, 0
      %p107 = por %p105, %p106
      %s109 = sadd.s32 %s108, 1
      %p112 = scmp.eq.s32.totalorder %s13, 4
      %p113 = scmp.ne.s32.totalorder %s108, %s110
      %p114 = scmp.eq.s32.totalorder %s13, 0
      %p115 = por %p113, %p114
      %p116 = scmp.ne.s32.totalorder %s108, %s110
      %p117 = scmp.eq.s32.totalorder %s18, 4
      %p118 = por %p116, %p117
      %p119 = scmp.ne.s32.totalorder %s110, %s111
      %p120 = scmp.eq.s32.totalorder %s18, 0
      %p121 = por %p119, %p120
      %p122 = scmp.ne.s32.totalorder %s110, %s111
      %p123 = scmp.eq.s32.totalorder %s19, 4
      %p124 = por %p122, %p123
      %p126 = scmp.ne.s32.totalorder %s111, %s125
      %p127 = scmp.eq.s32.totalorder %s19, 0
      %p128 = por %p126, %p127
      %s129 = ssub.s32 %s20, %s32
      %p130 = scmp.eq.s32.totalorder %s129, 0
      %s132 = sadd.s32 %s131, 1
      %s133 = scalar_select %p130, %s131, %s132
      %p136 = pneg %p130
      %p137 = scmp.eq.s32.totalorder %s13, 4
      %p138 = por %p136, %p137
      %p139 = scmp.ne.s32.totalorder %s131, %s134
      %p140 = scmp.eq.s32.totalorder %s13, 0
      %p141 = por %p139, %p140
      %p142 = scmp.ne.s32.totalorder %s131, %s134
      %p143 = scmp.eq.s32.totalorder %s18, 4
      %p144 = por %p142, %p143
      %p145 = scmp.ne.s32.totalorder %s134, %s135
      %p146 = scmp.eq.s32.totalorder %s18, 0
      %p147 = por %p145, %p146
      %p148 = scmp.ne.s32.totalorder %s134, %s135
      %p149 = scmp.eq.s32.totalorder %s19, 4
      %p150 = por %p148, %p149
      %p152 = scmp.ne.s32.totalorder %s135, %s151
      %p153 = scmp.eq.s32.totalorder %s19, 0
      %p154 = por %p152, %p153
      %p155 = scmp.le.s32.totalorder 1, %s13
      %p156 = scmp.lt.s32.totalorder %s13, 6
      %p157 = pnand %p155, %p156
      %p158 = pneg %p157
      // Predicated region
      $region9: #{graph_convolution.1} parent=5 // pred_check
        _
      $region10: #{graph_convolution.1} parent=5 // pred_check_branch
        %160 = sbr.rel (%p157) target = $region12
      $region11: #{graph_convolution.1} parent=5 // pred_region
        %s161 = ssub.s32 %s13, 1
        // Predicated region
        $region13: #{graph_convolution.1} parent=11 // pred_check
          %p162 = pneg %p79
        $region14: #{graph_convolution.1} parent=11 // pred_check_branch
          %164 = sbr.rel (%p162) target = $region16
        $region15: #{graph_convolution.1} parent=11 // pred_region
          %s165 = smul.u32 80, %s23
          %p166 = scmp.lt.s32.totalorder %s165, 79
          %s167 = scalar_select %p166, %s165, 79
          %s168 = smul.addr %s167, 4
          %s169 = scalar_lea.vmem %s1, %s168
          %s170 = smul.u32 80, %s23
        $region16: #{graph_convolution.1} parent=11 // pred_fallthru
          _
        // Predicated region
        $region17: #{graph_convolution.1} parent=11 // pred_check
          %p171 = pneg %p100
        $region18: #{graph_convolution.1} parent=11 // pred_check_branch
          %173 = sbr.rel (%p171) target = $region20
        $region19: #{graph_convolution.1} parent=11 // pred_region
          _
        $region20: #{graph_convolution.1} parent=11 // pred_fallthru
          _
        // Predicated region
        $region21: #{graph_convolution.1} parent=11 // pred_check
          %p174 = pneg %p121
        $region22: #{graph_convolution.1} parent=11 // pred_check_branch
          %176 = sbr.rel (%p174) target = $region24
        $region23: #{graph_convolution.1} parent=11 // pred_region
          _
        $region24: #{graph_convolution.1} parent=11 // pred_fallthru
          _
      $region12: #{graph_convolution.1} parent=5 // pred_fallthru
        _
      %p177 = scmp.lt.s32.totalorder %s13, 5
      // Predicated region
      $region25: #{graph_convolution.1} parent=5 // pred_check
        %p178 = pneg %p177
      $region26: #{graph_convolution.1} parent=5 // pred_check_branch
        %180 = sbr.rel (%p178) target = $region28
      $region27: #{graph_convolution.1} parent=5 // pred_region
        // Predicated region
        $region29: #{graph_convolution.1} parent=27 // pred_check
          %p181 = pneg %p47
        $region30: #{graph_convolution.1} parent=27 // pred_check_branch
          %183 = sbr.rel (%p181) target = $region32
        $region31: #{graph_convolution.1} parent=27 // pred_region
          %s184 = sand.u32 %s37, 1
          %s185 = scalar_lea.sflag [#allocation4], %s184
          %s186 = sand.u32 %s37, 1
          %s187 = smul.addr %s186, 640
          %s188 = scalar_lea.vmem [#allocation3], %s187
          %s189 = smul.u32 16, %s20
          %s190 = smul.u32 5, %s21
          %s192 = ssub.s32 10240, 10240
          %193 = vsyncadd %s185, %s192
          %s194 = smul.addr %s189, 5
          %s195 = sadd.s32 %s190, %s194
          %s196 = smul.addr %s195, 128
          %s197 = scalar_lea.hbm %s0, %s196
          %s198 = sshll.u32 %s188, 4
          %s199 = int_to_ptr.vmem [resolvable:$true] %s198
          %204 = dma.hbm_to_vmem [thread:$0]  %s197, 10240, %s199, %s185, 640, 640, 40
        $region32: #{graph_convolution.1} parent=27 // pred_fallthru
          _
      $region28: #{graph_convolution.1} parent=5 // pred_fallthru
        _
      %p205 = scmp.le.s32.totalorder 1, %s13
      %p206 = scmp.lt.s32.totalorder %s13, 6
      %p207 = pnand %p205, %p206
      %p208 = pneg %p207
      // Predicated region
      $region33: #{graph_convolution.1} parent=5 // pred_check
        _
      $region34: #{graph_convolution.1} parent=5 // pred_check_branch
        %210 = sbr.rel (%p207) target = $region36
      $region35: #{graph_convolution.1} parent=5 // pred_region
        %s211 = ssub.s32 %s13, 1
        %s212 = sand.u32 %s40, 1
        %s213 = scalar_lea.sflag [#allocation4], %s212
        %s214 = sand.u32 %s40, 1
        %s215 = smul.addr %s214, 640
        %s216 = scalar_lea.vmem [#allocation3], %s215
        // Predicated region
        $region37: #{graph_convolution.1} parent=35 // pred_check
          %p217 = pneg %p53
        $region38: #{graph_convolution.1} parent=35 // pred_check_branch
          %219 = sbr.rel (%p217) target = $region40
        $region39: #{graph_convolution.1} parent=35 // pred_region
          %220 = dma.done %s213, 10240
        $region40: #{graph_convolution.1} parent=35 // pred_fallthru
          _
        %s221 = sand.u32 %s40, 1
        %s222 = scalar_lea.sflag [#allocation4], %s221
        %s223 = sand.u32 %s40, 1
        %s224 = smul.addr %s223, 640
        %s225 = scalar_lea.vmem [#allocation3], %s224
        %p226 = pneg %p53
        %p227 = pneg %p50
        %s228 = smul.u32 80, %s23
        %p229 = scmp.lt.s32.totalorder %s228, 79
        %s230 = scalar_select %p229, %s228, 79
        %s231 = smul.addr %s230, 4
        %s232 = scalar_lea.vmem %s1, %s231
        %p233 = pneg %p79
        %p234 = pneg %p76
        %p235 = pneg %p100
        %p236 = pneg %p97
        %p237 = pneg %p121
        %p238 = pneg %p118
        %p239 = pneg %p147
        %p240 = pneg %p144
        %s241 = smul.u32 16, %s22
        %p242 = scmp.lt.s32.totalorder %s241, 79
        %s243 = scalar_select %p242, %s241, 79
        %s244 = smul.addr %s243, 8
        %s245 = scalar_lea.vmem %s4, %s244
        %s246 = smul.u32 16, %s22
        %s247 = smul.u32 5, %s23
        %s248 = smul.u32 80, %s23
        %p249 = scmp.lt.s32.totalorder %s248, 79
        %s250 = scalar_select %p249, %s248, 79
        %s251 = smul.addr %s250, 4
        %s252 = scalar_lea.vmem %s1, %s251
        %s253 = smul.u32 80, %s23
        %s254 = smul.u32 16, %s22
        %p255 = scmp.lt.s32.totalorder %s254, 79
        %s256 = scalar_select %p255, %s254, 79
        %s257 = smul.addr %s256, 8
        %s258 = scalar_lea.vmem %s4, %s257
        %s259 = smul.u32 16, %s22
        %p261 = scmp.eq.s32.totalorder %s23, 0
        // Predicated region
        $region41: #{graph_convolution.1} parent=35 // pred_check
          %p262 = pneg %p261
        $region42: #{graph_convolution.1} parent=35 // pred_check_branch
          %264 = sbr.rel (%p262) target = $region44
        $region43: #{graph_convolution.1} parent=35 // pred_region
          %265 = vst [vmem:[#allocation2] sm:$0xff] 0.0
          %266 = vst [vmem:[#allocation2 + $0x8] sm:$0xff] 0.0
          %267 = vst [vmem:[#allocation2 + $0x10] sm:$0xff] 0.0
          %268 = vst [vmem:[#allocation2 + $0x18] sm:$0xff] 0.0
          %269 = vst [vmem:[#allocation2 + $0x20] sm:$0xff] 0.0
          %270 = vst [vmem:[#allocation2 + $0x28] sm:$0xff] 0.0
          %271 = vst [vmem:[#allocation2 + $0x30] sm:$0xff] 0.0
          %272 = vst [vmem:[#allocation2 + $0x38] sm:$0xff] 0.0
          %273 = vst [vmem:[#allocation2 + $0x40] sm:$0xff] 0.0
          %274 = vst [vmem:[#allocation2 + $0x48] sm:$0xff] 0.0
          %275 = vst [vmem:[#allocation2 + $0x50] sm:$0xff] 0.0
          %276 = vst [vmem:[#allocation2 + $0x58] sm:$0xff] 0.0
          %277 = vst [vmem:[#allocation2 + $0x60] sm:$0xff] 0.0
          %278 = vst [vmem:[#allocation2 + $0x68] sm:$0xff] 0.0
          %279 = vst [vmem:[#allocation2 + $0x70] sm:$0xff] 0.0
          %280 = vst [vmem:[#allocation2 + $0x78] sm:$0xff] 0.0
        $region44: #{graph_convolution.1} parent=35 // pred_fallthru
          _
        %v281 = vld [vmem:[%s252] sm:$0xf]
        %v282 = vld [vmem:[%s252 + $0x4] sm:$0xf]
        %v283 = vld [vmem:[%s252 + $0x8] sm:$0xf]
        %v284 = vld [vmem:[%s252 + $0xc] sm:$0xf]
        %v285 = vld [vmem:[%s252 + $0x10] sm:$0xf]
        %v286 = vld [vmem:[%s252 + $0x14] sm:$0xf]
        %v287 = vld [vmem:[%s252 + $0x18] sm:$0xf]
        %v288 = vld [vmem:[%s252 + $0x1c] sm:$0xf]
        %v289 = vld [vmem:[%s252 + $0x20] sm:$0xf]
        %v290 = vld [vmem:[%s252 + $0x24] sm:$0xf]
        %v291 = vld [vmem:[%s252 + $0x28] sm:$0xf]
        %v292 = vld [vmem:[%s252 + $0x2c] sm:$0xf]
        %v293 = vld [vmem:[%s252 + $0x30] sm:$0xf]
        %v294 = vld [vmem:[%s252 + $0x34] sm:$0xf]
        %v295 = vld [vmem:[%s252 + $0x38] sm:$0xf]
        %v296 = vld [vmem:[%s252 + $0x3c] sm:$0xf]
        %v297 = vld [vmem:[%s252 + $0x40] sm:$0xf]
        %v298 = vld [vmem:[%s252 + $0x44] sm:$0xf]
        %v299 = vld [vmem:[%s252 + $0x48] sm:$0xf]
        %v300 = vld [vmem:[%s252 + $0x4c] sm:$0xf]
        %v301 = vld [vmem:[%s252 + $0x50] sm:$0xf]
        %v302 = vld [vmem:[%s252 + $0x54] sm:$0xf]
        %v303 = vld [vmem:[%s252 + $0x58] sm:$0xf]
        %v304 = vld [vmem:[%s252 + $0x5c] sm:$0xf]
        %v305 = vld [vmem:[%s252 + $0x60] sm:$0xf]
        %v306 = vld [vmem:[%s252 + $0x64] sm:$0xf]
        %v307 = vld [vmem:[%s252 + $0x68] sm:$0xf]
        %v308 = vld [vmem:[%s252 + $0x6c] sm:$0xf]
        %v309 = vld [vmem:[%s252 + $0x70] sm:$0xf]
        %v310 = vld [vmem:[%s252 + $0x74] sm:$0xf]
        %v311 = vld [vmem:[%s252 + $0x78] sm:$0xf]
        %v312 = vld [vmem:[%s252 + $0x7c] sm:$0xf]
        %v313 = vld [vmem:[%s252 + $0x80] sm:$0xf]
        %v314 = vld [vmem:[%s252 + $0x84] sm:$0xf]
        %v315 = vld [vmem:[%s252 + $0x88] sm:$0xf]
        %v316 = vld [vmem:[%s252 + $0x8c] sm:$0xf]
        %v317 = vld [vmem:[%s252 + $0x90] sm:$0xf]
        %v318 = vld [vmem:[%s252 + $0x94] sm:$0xf]
        %v319 = vld [vmem:[%s252 + $0x98] sm:$0xf]
        %v320 = vld [vmem:[%s252 + $0x9c] sm:$0xf]
        %v321 = vld [vmem:[%s252 + $0xa0] sm:$0xf]
        %v322 = vld [vmem:[%s252 + $0xa4] sm:$0xf]
        %v323 = vld [vmem:[%s252 + $0xa8] sm:$0xf]
        %v324 = vld [vmem:[%s252 + $0xac] sm:$0xf]
        %v325 = vld [vmem:[%s252 + $0xb0] sm:$0xf]
        %v326 = vld [vmem:[%s252 + $0xb4] sm:$0xf]
        %v327 = vld [vmem:[%s252 + $0xb8] sm:$0xf]
        %v328 = vld [vmem:[%s252 + $0xbc] sm:$0xf]
        %v329 = vld [vmem:[%s252 + $0xc0] sm:$0xf]
        %v330 = vld [vmem:[%s252 + $0xc4] sm:$0xf]
        %v331 = vld [vmem:[%s252 + $0xc8] sm:$0xf]
        %v332 = vld [vmem:[%s252 + $0xcc] sm:$0xf]
        %v333 = vld [vmem:[%s252 + $0xd0] sm:$0xf]
        %v334 = vld [vmem:[%s252 + $0xd4] sm:$0xf]
        %v335 = vld [vmem:[%s252 + $0xd8] sm:$0xf]
        %v336 = vld [vmem:[%s252 + $0xdc] sm:$0xf]
        %v337 = vld [vmem:[%s252 + $0xe0] sm:$0xf]
        %v338 = vld [vmem:[%s252 + $0xe4] sm:$0xf]
        %v339 = vld [vmem:[%s252 + $0xe8] sm:$0xf]
        %v340 = vld [vmem:[%s252 + $0xec] sm:$0xf]
        %v341 = vld [vmem:[%s252 + $0xf0] sm:$0xf]
        %v342 = vld [vmem:[%s252 + $0xf4] sm:$0xf]
        %v343 = vld [vmem:[%s252 + $0xf8] sm:$0xf]
        %v344 = vld [vmem:[%s252 + $0xfc] sm:$0xf]
        %v345 = vld [vmem:[%s252 + $0x100] sm:$0xf]
        %v346 = vld [vmem:[%s252 + $0x104] sm:$0xf]
        %v347 = vld [vmem:[%s252 + $0x108] sm:$0xf]
        %v348 = vld [vmem:[%s252 + $0x10c] sm:$0xf]
        %v349 = vld [vmem:[%s252 + $0x110] sm:$0xf]
        %v350 = vld [vmem:[%s252 + $0x114] sm:$0xf]
        %v351 = vld [vmem:[%s252 + $0x118] sm:$0xf]
        %v352 = vld [vmem:[%s252 + $0x11c] sm:$0xf]
        %v353 = vld [vmem:[%s252 + $0x120] sm:$0xf]
        %v354 = vld [vmem:[%s252 + $0x124] sm:$0xf]
        %v355 = vld [vmem:[%s252 + $0x128] sm:$0xf]
        %v356 = vld [vmem:[%s252 + $0x12c] sm:$0xf]
        %v357 = vld [vmem:[%s252 + $0x130] sm:$0xf]
        %v358 = vld [vmem:[%s252 + $0x134] sm:$0xf]
        %v359 = vld [vmem:[%s252 + $0x138] sm:$0xf]
        %v360 = vld [vmem:[%s252 + $0x13c] sm:$0xf]
        %v361 = vld [vmem:[%s2] sm:$0xf]
        %v362 = vld [vmem:[%s2 + $0x4] sm:$0xf]
        %v363 = vld [vmem:[%s2 + $0x8] sm:$0xf]
        %v364 = vld [vmem:[%s2 + $0xc] sm:$0xf]
        %v365 = vld [vmem:[%s2 + $0x10] sm:$0xf]
        %v366 = vld [vmem:[%s2 + $0x14] sm:$0xf]
        %v367 = vld [vmem:[%s2 + $0x18] sm:$0xf]
        %v368 = vld [vmem:[%s2 + $0x1c] sm:$0xf]
        %v449 = vunpack.c.l.b16 %v281
        %v450 = vunpack.c.l.b16 %v282
        %v451 = vunpack.c.l.b16 %v283
        %v452 = vunpack.c.l.b16 %v284
        %v453 = vunpack.c.l.b16 %v285
        %v454 = vunpack.c.l.b16 %v286
        %v455 = vunpack.c.l.b16 %v287
        %v456 = vunpack.c.l.b16 %v288
        %v457 = vunpack.c.l.b16 %v289
        %v458 = vunpack.c.l.b16 %v290
        %v459 = vunpack.c.l.b16 %v291
        %v460 = vunpack.c.l.b16 %v292
        %v461 = vunpack.c.l.b16 %v293
        %v462 = vunpack.c.l.b16 %v294
        %v463 = vunpack.c.l.b16 %v295
        %v464 = vunpack.c.l.b16 %v296
        %v465 = vunpack.c.l.b16 %v297
        %v466 = vunpack.c.l.b16 %v298
        %v467 = vunpack.c.l.b16 %v299
        %v468 = vunpack.c.l.b16 %v300
        %v469 = vunpack.c.l.b16 %v301
        %v470 = vunpack.c.l.b16 %v302
        %v471 = vunpack.c.l.b16 %v303
        %v472 = vunpack.c.l.b16 %v304
        %v473 = vunpack.c.l.b16 %v305
        %v474 = vunpack.c.l.b16 %v306
        %v475 = vunpack.c.l.b16 %v307
        %v476 = vunpack.c.l.b16 %v308
        %v477 = vunpack.c.l.b16 %v309
        %v478 = vunpack.c.l.b16 %v310
        %v479 = vunpack.c.l.b16 %v311
        %v480 = vunpack.c.l.b16 %v312
        %v481 = vunpack.c.l.b16 %v313
        %v482 = vunpack.c.l.b16 %v314
        %v483 = vunpack.c.l.b16 %v315
        %v484 = vunpack.c.l.b16 %v316
        %v485 = vunpack.c.l.b16 %v317
        %v486 = vunpack.c.l.b16 %v318
        %v487 = vunpack.c.l.b16 %v319
        %v488 = vunpack.c.l.b16 %v320
        %v489 = vunpack.c.l.b16 %v321
        %v490 = vunpack.c.l.b16 %v322
        %v491 = vunpack.c.l.b16 %v323
        %v492 = vunpack.c.l.b16 %v324
        %v493 = vunpack.c.l.b16 %v325
        %v494 = vunpack.c.l.b16 %v326
        %v495 = vunpack.c.l.b16 %v327
        %v496 = vunpack.c.l.b16 %v328
        %v497 = vunpack.c.l.b16 %v329
        %v498 = vunpack.c.l.b16 %v330
        %v499 = vunpack.c.l.b16 %v331
        %v500 = vunpack.c.l.b16 %v332
        %v501 = vunpack.c.l.b16 %v333
        %v502 = vunpack.c.l.b16 %v334
        %v503 = vunpack.c.l.b16 %v335
        %v504 = vunpack.c.l.b16 %v336
        %v505 = vunpack.c.l.b16 %v337
        %v506 = vunpack.c.l.b16 %v338
        %v507 = vunpack.c.l.b16 %v339
        %v508 = vunpack.c.l.b16 %v340
        %v509 = vunpack.c.l.b16 %v341
        %v510 = vunpack.c.l.b16 %v342
        %v511 = vunpack.c.l.b16 %v343
        %v512 = vunpack.c.l.b16 %v344
        %v513 = vunpack.c.l.b16 %v345
        %v514 = vunpack.c.l.b16 %v346
        %v515 = vunpack.c.l.b16 %v347
        %v516 = vunpack.c.l.b16 %v348
        %v517 = vunpack.c.l.b16 %v349
        %v518 = vunpack.c.l.b16 %v350
        %v519 = vunpack.c.l.b16 %v351
        %v520 = vunpack.c.l.b16 %v352
        %v521 = vunpack.c.l.b16 %v353
        %v522 = vunpack.c.l.b16 %v354
        %v523 = vunpack.c.l.b16 %v355
        %v524 = vunpack.c.l.b16 %v356
        %v525 = vunpack.c.l.b16 %v357
        %v526 = vunpack.c.l.b16 %v358
        %v527 = vunpack.c.l.b16 %v359
        %v528 = vunpack.c.l.b16 %v360
        %v529 = vpack.c.b16 %v450, %v449
        %v530 = vpack.c.b16 %v452, %v451
        %v531 = vpack.c.b16 %v454, %v453
        %v532 = vpack.c.b16 %v456, %v455
        %v533 = vpack.c.b16 %v458, %v457
        %v534 = vpack.c.b16 %v460, %v459
        %v535 = vpack.c.b16 %v462, %v461
        %v536 = vpack.c.b16 %v464, %v463
        %v537 = vpack.c.b16 %v466, %v465
        %v538 = vpack.c.b16 %v468, %v467
        %v539 = vpack.c.b16 %v470, %v469
        %v540 = vpack.c.b16 %v472, %v471
        %v541 = vpack.c.b16 %v474, %v473
        %v542 = vpack.c.b16 %v476, %v475
        %v543 = vpack.c.b16 %v478, %v477
        %v544 = vpack.c.b16 %v480, %v479
        %v545 = vpack.c.b16 %v482, %v481
        %v546 = vpack.c.b16 %v484, %v483
        %v547 = vpack.c.b16 %v486, %v485
        %v548 = vpack.c.b16 %v488, %v487
        %v549 = vpack.c.b16 %v490, %v489
        %v550 = vpack.c.b16 %v492, %v491
        %v551 = vpack.c.b16 %v494, %v493
        %v552 = vpack.c.b16 %v496, %v495
        %v553 = vpack.c.b16 %v498, %v497
        %v554 = vpack.c.b16 %v500, %v499
        %v555 = vpack.c.b16 %v502, %v501
        %v556 = vpack.c.b16 %v504, %v503
        %v557 = vpack.c.b16 %v506, %v505
        %v558 = vpack.c.b16 %v508, %v507
        %v559 = vpack.c.b16 %v510, %v509
        %v560 = vpack.c.b16 %v512, %v511
        %v561 = vpack.c.b16 %v514, %v513
        %v562 = vpack.c.b16 %v516, %v515
        %v563 = vpack.c.b16 %v518, %v517
        %v564 = vpack.c.b16 %v520, %v519
        %v565 = vpack.c.b16 %v522, %v521
        %v566 = vpack.c.b16 %v524, %v523
        %v567 = vpack.c.b16 %v526, %v525
        %v568 = vpack.c.b16 %v528, %v527
        %v577 = vunpack.c.l.b16 %v361
        %v578 = vunpack.c.l.b16 %v362
        %v579 = vunpack.c.l.b16 %v363
        %v580 = vunpack.c.l.b16 %v364
        %v581 = vunpack.c.l.b16 %v365
        %v582 = vunpack.c.l.b16 %v366
        %v583 = vunpack.c.l.b16 %v367
        %v584 = vunpack.c.l.b16 %v368
        %v585 = vpack.c.b16 %v578, %v577
        %v586 = vpack.c.b16 %v580, %v579
        %v587 = vpack.c.b16 %v582, %v581
        %v588 = vpack.c.b16 %v584, %v583
        %vm593 = vcmask 523264
        %v595 = vsel %vm593, %v529, 0
        %v598 = vsel %vm593, %v530, 0
        %v601 = vsel %vm593, %v531, 0
        %v604 = vsel %vm593, %v532, 0
        %v607 = vsel %vm593, %v533, 0
        %v610 = vsel %vm593, %v534, 0
        %v613 = vsel %vm593, %v535, 0
        %v616 = vsel %vm593, %v536, 0
        %v619 = vsel %vm593, %v537, 0
        %v622 = vsel %vm593, %v538, 0
        %v625 = vsel %vm593, %v539, 0
        %v628 = vsel %vm593, %v540, 0
        %v631 = vsel %vm593, %v541, 0
        %v634 = vsel %vm593, %v542, 0
        %v637 = vsel %vm593, %v543, 0
        %v640 = vsel %vm593, %v544, 0
        %v643 = vsel %vm593, %v545, 0
        %v646 = vsel %vm593, %v546, 0
        %v649 = vsel %vm593, %v547, 0
        %v652 = vsel %vm593, %v548, 0
        %v655 = vsel %vm593, %v549, 0
        %v658 = vsel %vm593, %v550, 0
        %v661 = vsel %vm593, %v551, 0
        %v664 = vsel %vm593, %v552, 0
        %v667 = vsel %vm593, %v553, 0
        %v670 = vsel %vm593, %v554, 0
        %v673 = vsel %vm593, %v555, 0
        %v676 = vsel %vm593, %v556, 0
        %v679 = vsel %vm593, %v557, 0
        %v682 = vsel %vm593, %v558, 0
        %v685 = vsel %vm593, %v559, 0
        %v688 = vsel %vm593, %v560, 0
        %v691 = vsel %vm593, %v561, 0
        %v694 = vsel %vm593, %v562, 0
        %v697 = vsel %vm593, %v563, 0
        %v700 = vsel %vm593, %v564, 0
        %v703 = vsel %vm593, %v565, 0
        %v706 = vsel %vm593, %v566, 0
        %v709 = vsel %vm593, %v567, 0
        %v712 = vsel %vm593, %v568, 0
        %714 = vmatprep.subr.bf16.mxu0 0
        %715 = vmatpush1.bf16.msra.mxu0 0
        %716 = vmatprep.subr.bf16.mxu0 0
        %717 = vmatpush1.bf16.msra.mxu0 0
        %718 = vmatprep.subr.bf16.mxu0 0
        %719 = vmatpush1.bf16.msra.mxu0 0
        %720 = vmatprep.subr.bf16.mxu0 0
        %721 = vmatpush1.bf16.msra.mxu0 0
        %722 = vmatprep.subr.bf16.mxu0 0
        %723 = vmatpush1.bf16.msra.mxu0 %v588
        %724 = vmatprep.subr.bf16.mxu0 0
        %725 = vmatpush1.bf16.msra.mxu0 %v587
        %726 = vmatprep.subr.bf16.mxu0 0
        %727 = vmatpush1.bf16.msra.mxu0 %v586
        %728 = vmatprep.subr.bf16.mxu0 0
        %729 = vmatpush1.bf16.msra.mxu0 %v585
        %730 = vmatprep.subr.bf16.mxu0 0
        %731 = vmatpush2.bf16.msra.mxu0 0
        %732 = vmatprep.subr.bf16.mxu0 0
        %733 = vmatpush2.bf16.msra.mxu0 0
        %734 = vmatprep.subr.bf16.mxu0 0
        %735 = vmatpush2.bf16.msra.mxu0 0
        %736 = vmatprep.subr.bf16.mxu0 0
        %737 = vmatpush2.bf16.msra.mxu0 0
        %738 = vmatprep.subr.bf16.mxu0 0
        %739 = vmatpush2.bf16.msra.mxu0 0
        %740 = vmatprep.subr.bf16.mxu0 0
        %741 = vmatpush2.bf16.msra.mxu0 0
        %742 = vmatprep.subr.bf16.mxu0 0
        %743 = vmatpush2.bf16.msra.mxu0 0
        %744 = vmatprep.subr.bf16.mxu0 0
        %745 = vmatpush2.bf16.msra.mxu0 0
        %746 = vmatprep.mubr.bf16.mxu0 0
        %747 = vmatmul.mubr.bf16.gmra.mxu0 %v595
        %v748 = vpop.f32.mrf.mxu0
        %v749 = vadd.f32 0.0, %v748
        %v750 = vpop.f32.mrf.mxu0
        %v751 = vpop.f32.mrf.mxu0
        %v752 = vadd.f32 0.0, %v751
        %v753 = vpop.f32.mrf.mxu0
        %754 = vmatprep.mubr.bf16.mxu0 0
        %755 = vmatmul.mubr.bf16.gmra.mxu0 %v598
        %v756 = vpop.f32.mrf.mxu0
        %v757 = vadd.f32 0.0, %v756
        %v758 = vpop.f32.mrf.mxu0
        %v759 = vpop.f32.mrf.mxu0
        %v760 = vadd.f32 0.0, %v759
        %v761 = vpop.f32.mrf.mxu0
        %762 = vmatprep.mubr.bf16.mxu0 0
        %763 = vmatmul.mubr.bf16.gmra.mxu0 %v601
        %v764 = vpop.f32.mrf.mxu0
        %v765 = vadd.f32 0.0, %v764
        %v766 = vpop.f32.mrf.mxu0
        %v767 = vpop.f32.mrf.mxu0
        %v768 = vadd.f32 0.0, %v767
        %v769 = vpop.f32.mrf.mxu0
        %770 = vmatprep.mubr.bf16.mxu0 0
        %771 = vmatmul.mubr.bf16.gmra.mxu0 %v604
        %v772 = vpop.f32.mrf.mxu0
        %v773 = vadd.f32 0.0, %v772
        %v774 = vpop.f32.mrf.mxu0
        %v775 = vpop.f32.mrf.mxu0
        %v776 = vadd.f32 0.0, %v775
        %v777 = vpop.f32.mrf.mxu0
        %778 = vmatprep.mubr.bf16.mxu0 0
        %779 = vmatmul.mubr.bf16.gmra.mxu0 %v607
        %v780 = vpop.f32.mrf.mxu0
        %v781 = vadd.f32 0.0, %v780
        %v782 = vpop.f32.mrf.mxu0
        %v783 = vpop.f32.mrf.mxu0
        %v784 = vadd.f32 0.0, %v783
        %v785 = vpop.f32.mrf.mxu0
        %786 = vmatprep.mubr.bf16.mxu0 0
        %787 = vmatmul.mubr.bf16.gmra.mxu0 %v610
        %v788 = vpop.f32.mrf.mxu0
        %v789 = vadd.f32 0.0, %v788
        %v790 = vpop.f32.mrf.mxu0
        %v791 = vpop.f32.mrf.mxu0
        %v792 = vadd.f32 0.0, %v791
        %v793 = vpop.f32.mrf.mxu0
        %794 = vmatprep.mubr.bf16.mxu0 0
        %795 = vmatmul.mubr.bf16.gmra.mxu0 %v613
        %v796 = vpop.f32.mrf.mxu0
        %v797 = vadd.f32 0.0, %v796
        %v798 = vpop.f32.mrf.mxu0
        %v799 = vpop.f32.mrf.mxu0
        %v800 = vadd.f32 0.0, %v799
        %v801 = vpop.f32.mrf.mxu0
        %802 = vmatprep.mubr.bf16.mxu0 0
        %803 = vmatmul.mubr.bf16.gmra.mxu0 %v616
        %v804 = vpop.f32.mrf.mxu0
        %v805 = vadd.f32 0.0, %v804
        %v806 = vpop.f32.mrf.mxu0
        %v807 = vpop.f32.mrf.mxu0
        %v808 = vadd.f32 0.0, %v807
        %v809 = vpop.f32.mrf.mxu0
        %810 = vmatprep.mubr.bf16.mxu0 0
        %811 = vmatmul.mubr.bf16.gmra.mxu0 %v619
        %v812 = vpop.f32.mrf.mxu0
        %v813 = vadd.f32 0.0, %v812
        %v814 = vpop.f32.mrf.mxu0
        %v815 = vpop.f32.mrf.mxu0
        %v816 = vadd.f32 0.0, %v815
        %v817 = vpop.f32.mrf.mxu0
        %818 = vmatprep.mubr.bf16.mxu0 0
        %819 = vmatmul.mubr.bf16.gmra.mxu0 %v622
        %v820 = vpop.f32.mrf.mxu0
        %v821 = vadd.f32 0.0, %v820
        %v822 = vpop.f32.mrf.mxu0
        %v823 = vpop.f32.mrf.mxu0
        %v824 = vadd.f32 0.0, %v823
        %v825 = vpop.f32.mrf.mxu0
        %826 = vmatprep.mubr.bf16.mxu0 0
        %827 = vmatmul.mubr.bf16.gmra.mxu0 %v625
        %v828 = vpop.f32.mrf.mxu0
        %v829 = vadd.f32 0.0, %v828
        %v830 = vpop.f32.mrf.mxu0
        %v831 = vpop.f32.mrf.mxu0
        %v832 = vadd.f32 0.0, %v831
        %v833 = vpop.f32.mrf.mxu0
        %834 = vmatprep.mubr.bf16.mxu0 0
        %835 = vmatmul.mubr.bf16.gmra.mxu0 %v628
        %v836 = vpop.f32.mrf.mxu0
        %v837 = vadd.f32 0.0, %v836
        %v838 = vpop.f32.mrf.mxu0
        %v839 = vpop.f32.mrf.mxu0
        %v840 = vadd.f32 0.0, %v839
        %v841 = vpop.f32.mrf.mxu0
        %842 = vmatprep.mubr.bf16.mxu0 0
        %843 = vmatmul.mubr.bf16.gmra.mxu0 %v631
        %v844 = vpop.f32.mrf.mxu0
        %v845 = vadd.f32 0.0, %v844
        %v846 = vpop.f32.mrf.mxu0
        %v847 = vpop.f32.mrf.mxu0
        %v848 = vadd.f32 0.0, %v847
        %v849 = vpop.f32.mrf.mxu0
        %850 = vmatprep.mubr.bf16.mxu0 0
        %851 = vmatmul.mubr.bf16.gmra.mxu0 %v634
        %v852 = vpop.f32.mrf.mxu0
        %v853 = vadd.f32 0.0, %v852
        %v854 = vpop.f32.mrf.mxu0
        %v855 = vpop.f32.mrf.mxu0
        %v856 = vadd.f32 0.0, %v855
        %v857 = vpop.f32.mrf.mxu0
        %858 = vmatprep.mubr.bf16.mxu0 0
        %859 = vmatmul.mubr.bf16.gmra.mxu0 %v637
        %v860 = vpop.f32.mrf.mxu0
        %v861 = vadd.f32 0.0, %v860
        %v862 = vpop.f32.mrf.mxu0
        %v863 = vpop.f32.mrf.mxu0
        %v864 = vadd.f32 0.0, %v863
        %v865 = vpop.f32.mrf.mxu0
        %866 = vmatprep.mubr.bf16.mxu0 0
        %867 = vmatmul.mubr.bf16.gmra.mxu0 %v640
        %v868 = vpop.f32.mrf.mxu0
        %v869 = vadd.f32 0.0, %v868
        %v870 = vpop.f32.mrf.mxu0
        %v871 = vpop.f32.mrf.mxu0
        %v872 = vadd.f32 0.0, %v871
        %v873 = vpop.f32.mrf.mxu0
        %874 = vmatprep.mubr.bf16.mxu0 0
        %875 = vmatmul.mubr.bf16.gmra.mxu0 %v643
        %v876 = vpop.f32.mrf.mxu0
        %v877 = vadd.f32 0.0, %v876
        %v878 = vpop.f32.mrf.mxu0
        %v879 = vpop.f32.mrf.mxu0
        %v880 = vadd.f32 0.0, %v879
        %v881 = vpop.f32.mrf.mxu0
        %882 = vmatprep.mubr.bf16.mxu0 0
        %883 = vmatmul.mubr.bf16.gmra.mxu0 %v646
        %v884 = vpop.f32.mrf.mxu0
        %v885 = vadd.f32 0.0, %v884
        %v886 = vpop.f32.mrf.mxu0
        %v887 = vpop.f32.mrf.mxu0
        %v888 = vadd.f32 0.0, %v887
        %v889 = vpop.f32.mrf.mxu0
        %890 = vmatprep.mubr.bf16.mxu0 0
        %891 = vmatmul.mubr.bf16.gmra.mxu0 %v649
        %v892 = vpop.f32.mrf.mxu0
        %v893 = vadd.f32 0.0, %v892
        %v894 = vpop.f32.mrf.mxu0
        %v895 = vpop.f32.mrf.mxu0
        %v896 = vadd.f32 0.0, %v895
        %v897 = vpop.f32.mrf.mxu0
        %898 = vmatprep.mubr.bf16.mxu0 0
        %899 = vmatmul.mubr.bf16.gmra.mxu0 %v652
        %v900 = vpop.f32.mrf.mxu0
        %v901 = vadd.f32 0.0, %v900
        %v902 = vpop.f32.mrf.mxu0
        %v903 = vpop.f32.mrf.mxu0
        %v904 = vadd.f32 0.0, %v903
        %v905 = vpop.f32.mrf.mxu0
        %906 = vmatprep.mubr.bf16.mxu0 0
        %907 = vmatmul.mubr.bf16.gmra.mxu0 %v655
        %v908 = vpop.f32.mrf.mxu0
        %v909 = vadd.f32 0.0, %v908
        %v910 = vpop.f32.mrf.mxu0
        %v911 = vpop.f32.mrf.mxu0
        %v912 = vadd.f32 0.0, %v911
        %v913 = vpop.f32.mrf.mxu0
        %914 = vmatprep.mubr.bf16.mxu0 0
        %915 = vmatmul.mubr.bf16.gmra.mxu0 %v658
        %v916 = vpop.f32.mrf.mxu0
        %v917 = vadd.f32 0.0, %v916
        %v918 = vpop.f32.mrf.mxu0
        %v919 = vpop.f32.mrf.mxu0
        %v920 = vadd.f32 0.0, %v919
        %v921 = vpop.f32.mrf.mxu0
        %922 = vmatprep.mubr.bf16.mxu0 0
        %923 = vmatmul.mubr.bf16.gmra.mxu0 %v661
        %v924 = vpop.f32.mrf.mxu0
        %v925 = vadd.f32 0.0, %v924
        %v926 = vpop.f32.mrf.mxu0
        %v927 = vpop.f32.mrf.mxu0
        %v928 = vadd.f32 0.0, %v927
        %v929 = vpop.f32.mrf.mxu0
        %930 = vmatprep.mubr.bf16.mxu0 0
        %931 = vmatmul.mubr.bf16.gmra.mxu0 %v664
        %v932 = vpop.f32.mrf.mxu0
        %v933 = vadd.f32 0.0, %v932
        %v934 = vpop.f32.mrf.mxu0
        %v935 = vpop.f32.mrf.mxu0
        %v936 = vadd.f32 0.0, %v935
        %v937 = vpop.f32.mrf.mxu0
        %938 = vmatprep.mubr.bf16.mxu0 0
        %939 = vmatmul.mubr.bf16.gmra.mxu0 %v667
        %v940 = vpop.f32.mrf.mxu0
        %v941 = vadd.f32 0.0, %v940
        %v942 = vpop.f32.mrf.mxu0
        %v943 = vpop.f32.mrf.mxu0
        %v944 = vadd.f32 0.0, %v943
        %v945 = vpop.f32.mrf.mxu0
        %946 = vmatprep.mubr.bf16.mxu0 0
        %947 = vmatmul.mubr.bf16.gmra.mxu0 %v670
        %v948 = vpop.f32.mrf.mxu0
        %v949 = vadd.f32 0.0, %v948
        %v950 = vpop.f32.mrf.mxu0
        %v951 = vpop.f32.mrf.mxu0
        %v952 = vadd.f32 0.0, %v951
        %v953 = vpop.f32.mrf.mxu0
        %954 = vmatprep.mubr.bf16.mxu0 0
        %955 = vmatmul.mubr.bf16.gmra.mxu0 %v673
        %v956 = vpop.f32.mrf.mxu0
        %v957 = vadd.f32 0.0, %v956
        %v958 = vpop.f32.mrf.mxu0
        %v959 = vpop.f32.mrf.mxu0
        %v960 = vadd.f32 0.0, %v959
        %v961 = vpop.f32.mrf.mxu0
        %962 = vmatprep.mubr.bf16.mxu0 0
        %963 = vmatmul.mubr.bf16.gmra.mxu0 %v676
        %v964 = vpop.f32.mrf.mxu0
        %v965 = vadd.f32 0.0, %v964
        %v966 = vpop.f32.mrf.mxu0
        %v967 = vpop.f32.mrf.mxu0
        %v968 = vadd.f32 0.0, %v967
        %v969 = vpop.f32.mrf.mxu0
        %970 = vmatprep.mubr.bf16.mxu0 0
        %971 = vmatmul.mubr.bf16.gmra.mxu0 %v679
        %v972 = vpop.f32.mrf.mxu0
        %v973 = vadd.f32 0.0, %v972
        %v974 = vpop.f32.mrf.mxu0
        %v975 = vpop.f32.mrf.mxu0
        %v976 = vadd.f32 0.0, %v975
        %v977 = vpop.f32.mrf.mxu0
        %978 = vmatprep.mubr.bf16.mxu0 0
        %979 = vmatmul.mubr.bf16.gmra.mxu0 %v682
        %v980 = vpop.f32.mrf.mxu0
        %v981 = vadd.f32 0.0, %v980
        %v982 = vpop.f32.mrf.mxu0
        %v983 = vpop.f32.mrf.mxu0
        %v984 = vadd.f32 0.0, %v983
        %v985 = vpop.f32.mrf.mxu0
        %986 = vmatprep.mubr.bf16.mxu0 0
        %987 = vmatmul.mubr.bf16.gmra.mxu0 %v685
        %v988 = vpop.f32.mrf.mxu0
        %v989 = vadd.f32 0.0, %v988
        %v990 = vpop.f32.mrf.mxu0
        %v991 = vpop.f32.mrf.mxu0
        %v992 = vadd.f32 0.0, %v991
        %v993 = vpop.f32.mrf.mxu0
        %994 = vmatprep.mubr.bf16.mxu0 0
        %995 = vmatmul.mubr.bf16.gmra.mxu0 %v688
        %v996 = vpop.f32.mrf.mxu0
        %v997 = vadd.f32 0.0, %v996
        %v998 = vpop.f32.mrf.mxu0
        %v999 = vpop.f32.mrf.mxu0
        %v1000 = vadd.f32 0.0, %v999
        %v1001 = vpop.f32.mrf.mxu0
        %1002 = vmatprep.mubr.bf16.mxu0 0
        %1003 = vmatmul.mubr.bf16.gmra.mxu0 %v691
        %v1004 = vpop.f32.mrf.mxu0
        %v1005 = vadd.f32 0.0, %v1004
        %v1006 = vpop.f32.mrf.mxu0
        %v1007 = vpop.f32.mrf.mxu0
        %v1008 = vadd.f32 0.0, %v1007
        %v1009 = vpop.f32.mrf.mxu0
        %1010 = vmatprep.mubr.bf16.mxu0 0
        %1011 = vmatmul.mubr.bf16.gmra.mxu0 %v694
        %v1012 = vpop.f32.mrf.mxu0
        %v1013 = vadd.f32 0.0, %v1012
        %v1014 = vpop.f32.mrf.mxu0
        %v1015 = vpop.f32.mrf.mxu0
        %v1016 = vadd.f32 0.0, %v1015
        %v1017 = vpop.f32.mrf.mxu0
        %1018 = vmatprep.mubr.bf16.mxu0 0
        %1019 = vmatmul.mubr.bf16.gmra.mxu0 %v697
        %v1020 = vpop.f32.mrf.mxu0
        %v1021 = vadd.f32 0.0, %v1020
        %v1022 = vpop.f32.mrf.mxu0
        %v1023 = vpop.f32.mrf.mxu0
        %v1024 = vadd.f32 0.0, %v1023
        %v1025 = vpop.f32.mrf.mxu0
        %1026 = vmatprep.mubr.bf16.mxu0 0
        %1027 = vmatmul.mubr.bf16.gmra.mxu0 %v700
        %v1028 = vpop.f32.mrf.mxu0
        %v1029 = vadd.f32 0.0, %v1028
        %v1030 = vpop.f32.mrf.mxu0
        %v1031 = vpop.f32.mrf.mxu0
        %v1032 = vadd.f32 0.0, %v1031
        %v1033 = vpop.f32.mrf.mxu0
        %1034 = vmatprep.mubr.bf16.mxu0 0
        %1035 = vmatmul.mubr.bf16.gmra.mxu0 %v703
        %v1036 = vpop.f32.mrf.mxu0
        %v1037 = vadd.f32 0.0, %v1036
        %v1038 = vpop.f32.mrf.mxu0
        %v1039 = vpop.f32.mrf.mxu0
        %v1040 = vadd.f32 0.0, %v1039
        %v1041 = vpop.f32.mrf.mxu0
        %1042 = vmatprep.mubr.bf16.mxu0 0
        %1043 = vmatmul.mubr.bf16.gmra.mxu0 %v706
        %v1044 = vpop.f32.mrf.mxu0
        %v1045 = vadd.f32 0.0, %v1044
        %v1046 = vpop.f32.mrf.mxu0
        %v1047 = vpop.f32.mrf.mxu0
        %v1048 = vadd.f32 0.0, %v1047
        %v1049 = vpop.f32.mrf.mxu0
        %1050 = vmatprep.mubr.bf16.mxu0 0
        %1051 = vmatmul.mubr.bf16.gmra.mxu0 %v709
        %v1052 = vpop.f32.mrf.mxu0
        %v1053 = vadd.f32 0.0, %v1052
        %v1054 = vpop.f32.mrf.mxu0
        %v1055 = vpop.f32.mrf.mxu0
        %v1056 = vadd.f32 0.0, %v1055
        %v1057 = vpop.f32.mrf.mxu0
        %1058 = vmatprep.mubr.bf16.mxu0 0
        %1059 = vmatmul.mubr.bf16.gmra.mxu0 %v712
        %v1060 = vpop.f32.mrf.mxu0
        %v1061 = vadd.f32 0.0, %v1060
        %v1062 = vpop.f32.mrf.mxu0
        %v1063 = vpop.f32.mrf.mxu0
        %v1064 = vadd.f32 0.0, %v1063
        %v1065 = vpop.f32.mrf.mxu0
        %1066 = vdwg.mxu0
        %v1067 = vpack.c.bf16 %v752, %v749
        %v1068 = vpack.c.bf16 %v760, %v757
        %v1069 = vpack.c.bf16 %v768, %v765
        %v1070 = vpack.c.bf16 %v776, %v773
        %v1071 = vpack.c.bf16 %v784, %v781
        %v1072 = vpack.c.bf16 %v792, %v789
        %v1073 = vpack.c.bf16 %v800, %v797
        %v1074 = vpack.c.bf16 %v808, %v805
        %v1075 = vpack.c.bf16 %v816, %v813
        %v1076 = vpack.c.bf16 %v824, %v821
        %v1077 = vpack.c.bf16 %v832, %v829
        %v1078 = vpack.c.bf16 %v840, %v837
        %v1079 = vpack.c.bf16 %v848, %v845
        %v1080 = vpack.c.bf16 %v856, %v853
        %v1081 = vpack.c.bf16 %v864, %v861
        %v1082 = vpack.c.bf16 %v872, %v869
        %v1083 = vpack.c.bf16 %v880, %v877
        %v1084 = vpack.c.bf16 %v888, %v885
        %v1085 = vpack.c.bf16 %v896, %v893
        %v1086 = vpack.c.bf16 %v904, %v901
        %v1087 = vpack.c.bf16 %v912, %v909
        %v1088 = vpack.c.bf16 %v920, %v917
        %v1089 = vpack.c.bf16 %v928, %v925
        %v1090 = vpack.c.bf16 %v936, %v933
        %v1091 = vpack.c.bf16 %v944, %v941
        %v1092 = vpack.c.bf16 %v952, %v949
        %v1093 = vpack.c.bf16 %v960, %v957
        %v1094 = vpack.c.bf16 %v968, %v965
        %v1095 = vpack.c.bf16 %v976, %v973
        %v1096 = vpack.c.bf16 %v984, %v981
        %v1097 = vpack.c.bf16 %v992, %v989
        %v1098 = vpack.c.bf16 %v1000, %v997
        %v1099 = vpack.c.bf16 %v1008, %v1005
        %v1100 = vpack.c.bf16 %v1016, %v1013
        %v1101 = vpack.c.bf16 %v1024, %v1021
        %v1102 = vpack.c.bf16 %v1032, %v1029
        %v1103 = vpack.c.bf16 %v1040, %v1037
        %v1104 = vpack.c.bf16 %v1048, %v1045
        %v1105 = vpack.c.bf16 %v1056, %v1053
        %v1106 = vpack.c.bf16 %v1064, %v1061
        %v1107 = vld [vmem:[#allocation2] sm:$0xff]
        %v1108 = vld [vmem:[#allocation2 + $0x8] sm:$0xff]
        %v1109 = vld [vmem:[#allocation2 + $0x10] sm:$0xff]
        %v1110 = vld [vmem:[#allocation2 + $0x18] sm:$0xff]
        %v1111 = vld [vmem:[#allocation2 + $0x20] sm:$0xff]
        %v1112 = vld [vmem:[#allocation2 + $0x28] sm:$0xff]
        %v1113 = vld [vmem:[#allocation2 + $0x30] sm:$0xff]
        %v1114 = vld [vmem:[#allocation2 + $0x38] sm:$0xff]
        %v1115 = vld [vmem:[#allocation2 + $0x40] sm:$0xff]
        %v1116 = vld [vmem:[#allocation2 + $0x48] sm:$0xff]
        %v1117 = vld [vmem:[#allocation2 + $0x50] sm:$0xff]
        %v1118 = vld [vmem:[#allocation2 + $0x58] sm:$0xff]
        %v1119 = vld [vmem:[#allocation2 + $0x60] sm:$0xff]
        %v1120 = vld [vmem:[#allocation2 + $0x68] sm:$0xff]
        %v1121 = vld [vmem:[#allocation2 + $0x70] sm:$0xff]
        %v1122 = vld [vmem:[#allocation2 + $0x78] sm:$0xff]
        %v1123 = vld [vmem:[%s216] sm:$0xff]
        %v1124 = vld [vmem:[%s216 + $0x8] sm:$0xff]
        %v1125 = vld [vmem:[%s216 + $0x10] sm:$0xff]
        %v1126 = vld [vmem:[%s216 + $0x18] sm:$0xff]
        %v1127 = vld [vmem:[%s216 + $0x20] sm:$0xff]
        %v1128 = vld [vmem:[%s216 + $0x28] sm:$0xff]
        %v1129 = vld [vmem:[%s216 + $0x30] sm:$0xff]
        %v1130 = vld [vmem:[%s216 + $0x38] sm:$0xff]
        %v1131 = vld [vmem:[%s216 + $0x40] sm:$0xff]
        %v1132 = vld [vmem:[%s216 + $0x48] sm:$0xff]
        %v1133 = vld [vmem:[%s216 + $0x50] sm:$0xff]
        %v1134 = vld [vmem:[%s216 + $0x58] sm:$0xff]
        %v1135 = vld [vmem:[%s216 + $0x60] sm:$0xff]
        %v1136 = vld [vmem:[%s216 + $0x68] sm:$0xff]
        %v1137 = vld [vmem:[%s216 + $0x70] sm:$0xff]
        %v1138 = vld [vmem:[%s216 + $0x78] sm:$0xff]
        %v1139 = vld [vmem:[%s216 + $0x80] sm:$0xff]
        %v1140 = vld [vmem:[%s216 + $0x88] sm:$0xff]
        %v1141 = vld [vmem:[%s216 + $0x90] sm:$0xff]
        %v1142 = vld [vmem:[%s216 + $0x98] sm:$0xff]
        %v1143 = vld [vmem:[%s216 + $0xa0] sm:$0xff]
        %v1144 = vld [vmem:[%s216 + $0xa8] sm:$0xff]
        %v1145 = vld [vmem:[%s216 + $0xb0] sm:$0xff]
        %v1146 = vld [vmem:[%s216 + $0xb8] sm:$0xff]
        %v1147 = vld [vmem:[%s216 + $0xc0] sm:$0xff]
        %v1148 = vld [vmem:[%s216 + $0xc8] sm:$0xff]
        %v1149 = vld [vmem:[%s216 + $0xd0] sm:$0xff]
        %v1150 = vld [vmem:[%s216 + $0xd8] sm:$0xff]
        %v1151 = vld [vmem:[%s216 + $0xe0] sm:$0xff]
        %v1152 = vld [vmem:[%s216 + $0xe8] sm:$0xff]
        %v1153 = vld [vmem:[%s216 + $0xf0] sm:$0xff]
        %v1154 = vld [vmem:[%s216 + $0xf8] sm:$0xff]
        %v1155 = vld [vmem:[%s216 + $0x100] sm:$0xff]
        %v1156 = vld [vmem:[%s216 + $0x108] sm:$0xff]
        %v1157 = vld [vmem:[%s216 + $0x110] sm:$0xff]
        %v1158 = vld [vmem:[%s216 + $0x118] sm:$0xff]
        %v1159 = vld [vmem:[%s216 + $0x120] sm:$0xff]
        %v1160 = vld [vmem:[%s216 + $0x128] sm:$0xff]
        %v1161 = vld [vmem:[%s216 + $0x130] sm:$0xff]
        %v1162 = vld [vmem:[%s216 + $0x138] sm:$0xff]
        %v1163 = vld [vmem:[%s216 + $0x140] sm:$0xff]
        %v1164 = vld [vmem:[%s216 + $0x148] sm:$0xff]
        %v1165 = vld [vmem:[%s216 + $0x150] sm:$0xff]
        %v1166 = vld [vmem:[%s216 + $0x158] sm:$0xff]
        %v1167 = vld [vmem:[%s216 + $0x160] sm:$0xff]
        %v1168 = vld [vmem:[%s216 + $0x168] sm:$0xff]
        %v1169 = vld [vmem:[%s216 + $0x170] sm:$0xff]
        %v1170 = vld [vmem:[%s216 + $0x178] sm:$0xff]
        %v1171 = vld [vmem:[%s216 + $0x180] sm:$0xff]
        %v1172 = vld [vmem:[%s216 + $0x188] sm:$0xff]
        %v1173 = vld [vmem:[%s216 + $0x190] sm:$0xff]
        %v1174 = vld [vmem:[%s216 + $0x198] sm:$0xff]
        %v1175 = vld [vmem:[%s216 + $0x1a0] sm:$0xff]
        %v1176 = vld [vmem:[%s216 + $0x1a8] sm:$0xff]
        %v1177 = vld [vmem:[%s216 + $0x1b0] sm:$0xff]
        %v1178 = vld [vmem:[%s216 + $0x1b8] sm:$0xff]
        %v1179 = vld [vmem:[%s216 + $0x1c0] sm:$0xff]
        %v1180 = vld [vmem:[%s216 + $0x1c8] sm:$0xff]
        %v1181 = vld [vmem:[%s216 + $0x1d0] sm:$0xff]
        %v1182 = vld [vmem:[%s216 + $0x1d8] sm:$0xff]
        %v1183 = vld [vmem:[%s216 + $0x1e0] sm:$0xff]
        %v1184 = vld [vmem:[%s216 + $0x1e8] sm:$0xff]
        %v1185 = vld [vmem:[%s216 + $0x1f0] sm:$0xff]
        %v1186 = vld [vmem:[%s216 + $0x1f8] sm:$0xff]
        %v1187 = vld [vmem:[%s216 + $0x200] sm:$0xff]
        %v1188 = vld [vmem:[%s216 + $0x208] sm:$0xff]
        %v1189 = vld [vmem:[%s216 + $0x210] sm:$0xff]
        %v1190 = vld [vmem:[%s216 + $0x218] sm:$0xff]
        %v1191 = vld [vmem:[%s216 + $0x220] sm:$0xff]
        %v1192 = vld [vmem:[%s216 + $0x228] sm:$0xff]
        %v1193 = vld [vmem:[%s216 + $0x230] sm:$0xff]
        %v1194 = vld [vmem:[%s216 + $0x238] sm:$0xff]
        %v1195 = vld [vmem:[%s216 + $0x240] sm:$0xff]
        %v1196 = vld [vmem:[%s216 + $0x248] sm:$0xff]
        %v1197 = vld [vmem:[%s216 + $0x250] sm:$0xff]
        %v1198 = vld [vmem:[%s216 + $0x258] sm:$0xff]
        %v1199 = vld [vmem:[%s216 + $0x260] sm:$0xff]
        %v1200 = vld [vmem:[%s216 + $0x268] sm:$0xff]
        %v1201 = vld [vmem:[%s216 + $0x270] sm:$0xff]
        %v1202 = vld [vmem:[%s216 + $0x278] sm:$0xff]
        %v1203 = vpack.c.bf16 %v1128, %v1123
        %v1204 = vpack.c.bf16 %v1129, %v1124
        %v1205 = vpack.c.bf16 %v1130, %v1125
        %v1206 = vpack.c.bf16 %v1131, %v1126
        %v1207 = vpack.c.bf16 %v1132, %v1127
        %v1208 = vpack.c.bf16 %v1138, %v1133
        %v1209 = vpack.c.bf16 %v1139, %v1134
        %v1210 = vpack.c.bf16 %v1140, %v1135
        %v1211 = vpack.c.bf16 %v1141, %v1136
        %v1212 = vpack.c.bf16 %v1142, %v1137
        %v1213 = vpack.c.bf16 %v1148, %v1143
        %v1214 = vpack.c.bf16 %v1149, %v1144
        %v1215 = vpack.c.bf16 %v1150, %v1145
        %v1216 = vpack.c.bf16 %v1151, %v1146
        %v1217 = vpack.c.bf16 %v1152, %v1147
        %v1218 = vpack.c.bf16 %v1158, %v1153
        %v1219 = vpack.c.bf16 %v1159, %v1154
        %v1220 = vpack.c.bf16 %v1160, %v1155
        %v1221 = vpack.c.bf16 %v1161, %v1156
        %v1222 = vpack.c.bf16 %v1162, %v1157
        %v1223 = vpack.c.bf16 %v1168, %v1163
        %v1224 = vpack.c.bf16 %v1169, %v1164
        %v1225 = vpack.c.bf16 %v1170, %v1165
        %v1226 = vpack.c.bf16 %v1171, %v1166
        %v1227 = vpack.c.bf16 %v1172, %v1167
        %v1228 = vpack.c.bf16 %v1178, %v1173
        %v1229 = vpack.c.bf16 %v1179, %v1174
        %v1230 = vpack.c.bf16 %v1180, %v1175
        %v1231 = vpack.c.bf16 %v1181, %v1176
        %v1232 = vpack.c.bf16 %v1182, %v1177
        %v1233 = vpack.c.bf16 %v1188, %v1183
        %v1234 = vpack.c.bf16 %v1189, %v1184
        %v1235 = vpack.c.bf16 %v1190, %v1185
        %v1236 = vpack.c.bf16 %v1191, %v1186
        %v1237 = vpack.c.bf16 %v1192, %v1187
        %v1238 = vpack.c.bf16 %v1198, %v1193
        %v1239 = vpack.c.bf16 %v1199, %v1194
        %v1240 = vpack.c.bf16 %v1200, %v1195
        %v1241 = vpack.c.bf16 %v1201, %v1196
        %v1242 = vpack.c.bf16 %v1202, %v1197
        %1243 = vmatprep.subr.bf16.mxu0 0
        %1244 = vmatpush1.bf16.msra.mxu0 %v1074
        %1245 = vmatprep.subr.bf16.mxu0 0
        %1246 = vmatpush1.bf16.msra.mxu0 %v1073
        %1247 = vmatprep.subr.bf16.mxu0 0
        %1248 = vmatpush1.bf16.msra.mxu0 %v1072
        %1249 = vmatprep.subr.bf16.mxu0 0
        %1250 = vmatpush1.bf16.msra.mxu0 %v1071
        %1251 = vmatprep.subr.bf16.mxu0 0
        %1252 = vmatpush1.bf16.msra.mxu0 %v1070
        %1253 = vmatprep.subr.bf16.mxu0 0
        %1254 = vmatpush1.bf16.msra.mxu0 %v1069
        %1255 = vmatprep.subr.bf16.mxu0 0
        %1256 = vmatpush1.bf16.msra.mxu0 %v1068
        %1257 = vmatprep.subr.bf16.mxu0 0
        %1258 = vmatpush1.bf16.msra.mxu0 %v1067
        %1259 = vmatprep.subr.bf16.mxu0 0
        %1260 = vmatpush2.bf16.msra.mxu0 %v1082
        %1261 = vmatprep.subr.bf16.mxu0 0
        %1262 = vmatpush2.bf16.msra.mxu0 %v1081
        %1263 = vmatprep.subr.bf16.mxu0 0
        %1264 = vmatpush2.bf16.msra.mxu0 %v1080
        %1265 = vmatprep.subr.bf16.mxu0 0
        %1266 = vmatpush2.bf16.msra.mxu0 %v1079
        %1267 = vmatprep.subr.bf16.mxu0 0
        %1268 = vmatpush2.bf16.msra.mxu0 %v1078
        %1269 = vmatprep.subr.bf16.mxu0 0
        %1270 = vmatpush2.bf16.msra.mxu0 %v1077
        %1271 = vmatprep.subr.bf16.mxu0 0
        %1272 = vmatpush2.bf16.msra.mxu0 %v1076
        %1273 = vmatprep.subr.bf16.mxu0 0
        %1274 = vmatpush2.bf16.msra.mxu0 %v1075
        %1275 = vmatprep.mubr.bf16.mxu0 %v1204
        %1276 = vmatmul.mubr.bf16.gmra.mxu0 %v1203
        %v1277 = vpop.f32.mrf.mxu0
        %v1278 = vadd.f32 0.0, %v1277
        %v1279 = vpop.f32.mrf.mxu0
        %v1280 = vpop.f32.mrf.mxu0
        %v1281 = vadd.f32 0.0, %v1280
        %v1282 = vpop.f32.mrf.mxu0
        %1283 = vmatprep.mubr.bf16.mxu0 %v1209
        %1284 = vmatmul.mubr.bf16.gmra.mxu0 %v1208
        %v1285 = vpop.f32.mrf.mxu0
        %v1286 = vadd.f32 0.0, %v1285
        %v1287 = vpop.f32.mrf.mxu0
        %v1288 = vpop.f32.mrf.mxu0
        %v1289 = vadd.f32 0.0, %v1288
        %v1290 = vpop.f32.mrf.mxu0
        %1291 = vmatprep.mubr.bf16.mxu0 %v1214
        %1292 = vmatmul.mubr.bf16.gmra.mxu0 %v1213
        %v1293 = vpop.f32.mrf.mxu0
        %v1294 = vadd.f32 0.0, %v1293
        %v1295 = vpop.f32.mrf.mxu0
        %v1296 = vpop.f32.mrf.mxu0
        %v1297 = vadd.f32 0.0, %v1296
        %v1298 = vpop.f32.mrf.mxu0
        %1299 = vmatprep.mubr.bf16.mxu0 %v1219
        %1300 = vmatmul.mubr.bf16.gmra.mxu0 %v1218
        %v1301 = vpop.f32.mrf.mxu0
        %v1302 = vadd.f32 0.0, %v1301
        %v1303 = vpop.f32.mrf.mxu0
        %v1304 = vpop.f32.mrf.mxu0
        %v1305 = vadd.f32 0.0, %v1304
        %v1306 = vpop.f32.mrf.mxu0
        %1307 = vmatprep.mubr.bf16.mxu0 %v1224
        %1308 = vmatmul.mubr.bf16.gmra.mxu0 %v1223
        %v1309 = vpop.f32.mrf.mxu0
        %v1310 = vadd.f32 0.0, %v1309
        %v1311 = vpop.f32.mrf.mxu0
        %v1312 = vpop.f32.mrf.mxu0
        %v1313 = vadd.f32 0.0, %v1312
        %v1314 = vpop.f32.mrf.mxu0
        %1315 = vmatprep.mubr.bf16.mxu0 %v1229
        %1316 = vmatmul.mubr.bf16.gmra.mxu0 %v1228
        %v1317 = vpop.f32.mrf.mxu0
        %v1318 = vadd.f32 0.0, %v1317
        %v1319 = vpop.f32.mrf.mxu0
        %v1320 = vpop.f32.mrf.mxu0
        %v1321 = vadd.f32 0.0, %v1320
        %v1322 = vpop.f32.mrf.mxu0
        %1323 = vmatprep.mubr.bf16.mxu0 %v1234
        %1324 = vmatmul.mubr.bf16.gmra.mxu0 %v1233
        %v1325 = vpop.f32.mrf.mxu0
        %v1326 = vadd.f32 0.0, %v1325
        %v1327 = vpop.f32.mrf.mxu0
        %v1328 = vpop.f32.mrf.mxu0
        %v1329 = vadd.f32 0.0, %v1328
        %v1330 = vpop.f32.mrf.mxu0
        %1331 = vmatprep.mubr.bf16.mxu0 %v1239
        %1332 = vmatmul.mubr.bf16.gmra.mxu0 %v1238
        %v1333 = vpop.f32.mrf.mxu0
        %v1334 = vadd.f32 0.0, %v1333
        %v1335 = vpop.f32.mrf.mxu0
        %v1336 = vpop.f32.mrf.mxu0
        %v1337 = vadd.f32 0.0, %v1336
        %v1338 = vpop.f32.mrf.mxu0
        %1339 = vdwg.mxu0
        %1340 = vmatprep.subr.bf16.mxu0 0
        %1341 = vmatpush1.bf16.msra.mxu0 %v1090
        %1342 = vmatprep.subr.bf16.mxu0 0
        %1343 = vmatpush1.bf16.msra.mxu0 %v1089
        %1344 = vmatprep.subr.bf16.mxu0 0
        %1345 = vmatpush1.bf16.msra.mxu0 %v1088
        %1346 = vmatprep.subr.bf16.mxu0 0
        %1347 = vmatpush1.bf16.msra.mxu0 %v1087
        %1348 = vmatprep.subr.bf16.mxu0 0
        %1349 = vmatpush1.bf16.msra.mxu0 %v1086
        %1350 = vmatprep.subr.bf16.mxu0 0
        %1351 = vmatpush1.bf16.msra.mxu0 %v1085
        %1352 = vmatprep.subr.bf16.mxu0 0
        %1353 = vmatpush1.bf16.msra.mxu0 %v1084
        %1354 = vmatprep.subr.bf16.mxu0 0
        %1355 = vmatpush1.bf16.msra.mxu0 %v1083
        %1356 = vmatprep.subr.bf16.mxu0 0
        %1357 = vmatpush2.bf16.msra.mxu0 %v1098
        %1358 = vmatprep.subr.bf16.mxu0 0
        %1359 = vmatpush2.bf16.msra.mxu0 %v1097
        %1360 = vmatprep.subr.bf16.mxu0 0
        %1361 = vmatpush2.bf16.msra.mxu0 %v1096
        %1362 = vmatprep.subr.bf16.mxu0 0
        %1363 = vmatpush2.bf16.msra.mxu0 %v1095
        %1364 = vmatprep.subr.bf16.mxu0 0
        %1365 = vmatpush2.bf16.msra.mxu0 %v1094
        %1366 = vmatprep.subr.bf16.mxu0 0
        %1367 = vmatpush2.bf16.msra.mxu0 %v1093
        %1368 = vmatprep.subr.bf16.mxu0 0
        %1369 = vmatpush2.bf16.msra.mxu0 %v1092
        %1370 = vmatprep.subr.bf16.mxu0 0
        %1371 = vmatpush2.bf16.msra.mxu0 %v1091
        %1372 = vmatprep.mubr.bf16.mxu0 %v1206
        %1373 = vmatmul.mubr.bf16.gmra.mxu0 %v1205
        %v1374 = vpop.f32.mrf.mxu0
        %v1375 = vadd.f32 %v1278, %v1374
        %v1376 = vpop.f32.mrf.mxu0
        %v1377 = vpop.f32.mrf.mxu0
        %v1378 = vadd.f32 %v1281, %v1377
        %v1379 = vpop.f32.mrf.mxu0
        %1380 = vmatprep.mubr.bf16.mxu0 %v1211
        %1381 = vmatmul.mubr.bf16.gmra.mxu0 %v1210
        %v1382 = vpop.f32.mrf.mxu0
        %v1383 = vadd.f32 %v1286, %v1382
        %v1384 = vpop.f32.mrf.mxu0
        %v1385 = vpop.f32.mrf.mxu0
        %v1386 = vadd.f32 %v1289, %v1385
        %v1387 = vpop.f32.mrf.mxu0
        %1388 = vmatprep.mubr.bf16.mxu0 %v1216
        %1389 = vmatmul.mubr.bf16.gmra.mxu0 %v1215
        %v1390 = vpop.f32.mrf.mxu0
        %v1391 = vadd.f32 %v1294, %v1390
        %v1392 = vpop.f32.mrf.mxu0
        %v1393 = vpop.f32.mrf.mxu0
        %v1394 = vadd.f32 %v1297, %v1393
        %v1395 = vpop.f32.mrf.mxu0
        %1396 = vmatprep.mubr.bf16.mxu0 %v1221
        %1397 = vmatmul.mubr.bf16.gmra.mxu0 %v1220
        %v1398 = vpop.f32.mrf.mxu0
        %v1399 = vadd.f32 %v1302, %v1398
        %v1400 = vpop.f32.mrf.mxu0
        %v1401 = vpop.f32.mrf.mxu0
        %v1402 = vadd.f32 %v1305, %v1401
        %v1403 = vpop.f32.mrf.mxu0
        %1404 = vmatprep.mubr.bf16.mxu0 %v1226
        %1405 = vmatmul.mubr.bf16.gmra.mxu0 %v1225
        %v1406 = vpop.f32.mrf.mxu0
        %v1407 = vadd.f32 %v1310, %v1406
        %v1408 = vpop.f32.mrf.mxu0
        %v1409 = vpop.f32.mrf.mxu0
        %v1410 = vadd.f32 %v1313, %v1409
        %v1411 = vpop.f32.mrf.mxu0
        %1412 = vmatprep.mubr.bf16.mxu0 %v1231
        %1413 = vmatmul.mubr.bf16.gmra.mxu0 %v1230
        %v1414 = vpop.f32.mrf.mxu0
        %v1415 = vadd.f32 %v1318, %v1414
        %v1416 = vpop.f32.mrf.mxu0
        %v1417 = vpop.f32.mrf.mxu0
        %v1418 = vadd.f32 %v1321, %v1417
        %v1419 = vpop.f32.mrf.mxu0
        %1420 = vmatprep.mubr.bf16.mxu0 %v1236
        %1421 = vmatmul.mubr.bf16.gmra.mxu0 %v1235
        %v1422 = vpop.f32.mrf.mxu0
        %v1423 = vadd.f32 %v1326, %v1422
        %v1424 = vpop.f32.mrf.mxu0
        %v1425 = vpop.f32.mrf.mxu0
        %v1426 = vadd.f32 %v1329, %v1425
        %v1427 = vpop.f32.mrf.mxu0
        %1428 = vmatprep.mubr.bf16.mxu0 %v1241
        %1429 = vmatmul.mubr.bf16.gmra.mxu0 %v1240
        %v1430 = vpop.f32.mrf.mxu0
        %v1431 = vadd.f32 %v1334, %v1430
        %v1432 = vpop.f32.mrf.mxu0
        %v1433 = vpop.f32.mrf.mxu0
        %v1434 = vadd.f32 %v1337, %v1433
        %v1435 = vpop.f32.mrf.mxu0
        %1436 = vdwg.mxu0
        %1437 = vmatprep.subr.bf16.mxu0 0
        %1438 = vmatpush1.bf16.msra.mxu0 %v1106
        %1439 = vmatprep.subr.bf16.mxu0 0
        %1440 = vmatpush1.bf16.msra.mxu0 %v1105
        %1441 = vmatprep.subr.bf16.mxu0 0
        %1442 = vmatpush1.bf16.msra.mxu0 %v1104
        %1443 = vmatprep.subr.bf16.mxu0 0
        %1444 = vmatpush1.bf16.msra.mxu0 %v1103
        %1445 = vmatprep.subr.bf16.mxu0 0
        %1446 = vmatpush1.bf16.msra.mxu0 %v1102
        %1447 = vmatprep.subr.bf16.mxu0 0
        %1448 = vmatpush1.bf16.msra.mxu0 %v1101
        %1449 = vmatprep.subr.bf16.mxu0 0
        %1450 = vmatpush1.bf16.msra.mxu0 %v1100
        %1451 = vmatprep.subr.bf16.mxu0 0
        %1452 = vmatpush1.bf16.msra.mxu0 %v1099
        %1453 = vmatprep.subr.bf16.mxu0 0
        %1454 = vmatpush2.bf16.msra.mxu0 0
        %1455 = vmatprep.subr.bf16.mxu0 0
        %1456 = vmatpush2.bf16.msra.mxu0 0
        %1457 = vmatprep.subr.bf16.mxu0 0
        %1458 = vmatpush2.bf16.msra.mxu0 0
        %1459 = vmatprep.subr.bf16.mxu0 0
        %1460 = vmatpush2.bf16.msra.mxu0 0
        %1461 = vmatprep.subr.bf16.mxu0 0
        %1462 = vmatpush2.bf16.msra.mxu0 0
        %1463 = vmatprep.subr.bf16.mxu0 0
        %1464 = vmatpush2.bf16.msra.mxu0 0
        %1465 = vmatprep.subr.bf16.mxu0 0
        %1466 = vmatpush2.bf16.msra.mxu0 0
        %1467 = vmatprep.subr.bf16.mxu0 0
        %1468 = vmatpush2.bf16.msra.mxu0 0
        %1469 = vmatprep.mubr.bf16.mxu0 0
        %1470 = vmatmul.mubr.bf16.gmra.mxu0 %v1207
        %v1471 = vpop.f32.mrf.mxu0
        %v1472 = vadd.f32 %v1375, %v1471
        %v1473 = vpop.f32.mrf.mxu0
        %v1474 = vpop.f32.mrf.mxu0
        %v1475 = vadd.f32 %v1378, %v1474
        %v1476 = vpop.f32.mrf.mxu0
        %1477 = vmatprep.mubr.bf16.mxu0 0
        %1478 = vmatmul.mubr.bf16.gmra.mxu0 %v1212
        %v1479 = vpop.f32.mrf.mxu0
        %v1480 = vadd.f32 %v1383, %v1479
        %v1481 = vpop.f32.mrf.mxu0
        %v1482 = vpop.f32.mrf.mxu0
        %v1483 = vadd.f32 %v1386, %v1482
        %v1484 = vpop.f32.mrf.mxu0
        %1485 = vmatprep.mubr.bf16.mxu0 0
        %1486 = vmatmul.mubr.bf16.gmra.mxu0 %v1217
        %v1487 = vpop.f32.mrf.mxu0
        %v1488 = vadd.f32 %v1391, %v1487
        %v1489 = vpop.f32.mrf.mxu0
        %v1490 = vpop.f32.mrf.mxu0
        %v1491 = vadd.f32 %v1394, %v1490
        %v1492 = vpop.f32.mrf.mxu0
        %1493 = vmatprep.mubr.bf16.mxu0 0
        %1494 = vmatmul.mubr.bf16.gmra.mxu0 %v1222
        %v1495 = vpop.f32.mrf.mxu0
        %v1496 = vadd.f32 %v1399, %v1495
        %v1497 = vpop.f32.mrf.mxu0
        %v1498 = vpop.f32.mrf.mxu0
        %v1499 = vadd.f32 %v1402, %v1498
        %v1500 = vpop.f32.mrf.mxu0
        %1501 = vmatprep.mubr.bf16.mxu0 0
        %1502 = vmatmul.mubr.bf16.gmra.mxu0 %v1227
        %v1503 = vpop.f32.mrf.mxu0
        %v1504 = vadd.f32 %v1407, %v1503
        %v1505 = vpop.f32.mrf.mxu0
        %v1506 = vpop.f32.mrf.mxu0
        %v1507 = vadd.f32 %v1410, %v1506
        %v1508 = vpop.f32.mrf.mxu0
        %1509 = vmatprep.mubr.bf16.mxu0 0
        %1510 = vmatmul.mubr.bf16.gmra.mxu0 %v1232
        %v1511 = vpop.f32.mrf.mxu0
        %v1512 = vadd.f32 %v1415, %v1511
        %v1513 = vpop.f32.mrf.mxu0
        %v1514 = vpop.f32.mrf.mxu0
        %v1515 = vadd.f32 %v1418, %v1514
        %v1516 = vpop.f32.mrf.mxu0
        %1517 = vmatprep.mubr.bf16.mxu0 0
        %1518 = vmatmul.mubr.bf16.gmra.mxu0 %v1237
        %v1519 = vpop.f32.mrf.mxu0
        %v1520 = vadd.f32 %v1423, %v1519
        %v1521 = vpop.f32.mrf.mxu0
        %v1522 = vpop.f32.mrf.mxu0
        %v1523 = vadd.f32 %v1426, %v1522
        %v1524 = vpop.f32.mrf.mxu0
        %1525 = vmatprep.mubr.bf16.mxu0 0
        %1526 = vmatmul.mubr.bf16.gmra.mxu0 %v1242
        %v1527 = vpop.f32.mrf.mxu0
        %v1528 = vadd.f32 %v1431, %v1527
        %v1529 = vpop.f32.mrf.mxu0
        %v1530 = vpop.f32.mrf.mxu0
        %v1531 = vadd.f32 %v1434, %v1530
        %v1532 = vpop.f32.mrf.mxu0
        %1533 = vdwg.mxu0
        %v1534 = vadd.f32 %v1107, %v1472
        %v1535 = vadd.f32 %v1108, %v1475
        %v1536 = vadd.f32 %v1109, %v1480
        %v1537 = vadd.f32 %v1110, %v1483
        %v1538 = vadd.f32 %v1111, %v1488
        %v1539 = vadd.f32 %v1112, %v1491
        %v1540 = vadd.f32 %v1113, %v1496
        %v1541 = vadd.f32 %v1114, %v1499
        %v1542 = vadd.f32 %v1115, %v1504
        %v1543 = vadd.f32 %v1116, %v1507
        %v1544 = vadd.f32 %v1117, %v1512
        %v1545 = vadd.f32 %v1118, %v1515
        %v1546 = vadd.f32 %v1119, %v1520
        %v1547 = vadd.f32 %v1120, %v1523
        %v1548 = vadd.f32 %v1121, %v1528
        %v1549 = vadd.f32 %v1122, %v1531
        %1550 = vst [vmem:[#allocation2] sm:$0xff] %v1534
        %1551 = vst [vmem:[#allocation2 + $0x8] sm:$0xff] %v1535
        %1552 = vst [vmem:[#allocation2 + $0x10] sm:$0xff] %v1536
        %1553 = vst [vmem:[#allocation2 + $0x18] sm:$0xff] %v1537
        %1554 = vst [vmem:[#allocation2 + $0x20] sm:$0xff] %v1538
        %1555 = vst [vmem:[#allocation2 + $0x28] sm:$0xff] %v1539
        %1556 = vst [vmem:[#allocation2 + $0x30] sm:$0xff] %v1540
        %1557 = vst [vmem:[#allocation2 + $0x38] sm:$0xff] %v1541
        %1558 = vst [vmem:[#allocation2 + $0x40] sm:$0xff] %v1542
        %1559 = vst [vmem:[#allocation2 + $0x48] sm:$0xff] %v1543
        %1560 = vst [vmem:[#allocation2 + $0x50] sm:$0xff] %v1544
        %1561 = vst [vmem:[#allocation2 + $0x58] sm:$0xff] %v1545
        %1562 = vst [vmem:[#allocation2 + $0x60] sm:$0xff] %v1546
        %1563 = vst [vmem:[#allocation2 + $0x68] sm:$0xff] %v1547
        %1564 = vst [vmem:[#allocation2 + $0x70] sm:$0xff] %v1548
        %1565 = vst [vmem:[#allocation2 + $0x78] sm:$0xff] %v1549
        // Predicated region
        $region45: #{graph_convolution.1} parent=35 // pred_check
          %p1566 = pneg %p261
        $region46: #{graph_convolution.1} parent=35 // pred_check_branch
          %1568 = sbr.rel (%p1566) target = $region48
        $region47: #{graph_convolution.1} parent=35 // pred_region
          %v1569 = vld [vmem:[#allocation2] sm:$0xff]
          %v1570 = vld [vmem:[#allocation2 + $0x8] sm:$0xff]
          %v1571 = vld [vmem:[#allocation2 + $0x10] sm:$0xff]
          %v1572 = vld [vmem:[#allocation2 + $0x18] sm:$0xff]
          %v1573 = vld [vmem:[#allocation2 + $0x20] sm:$0xff]
          %v1574 = vld [vmem:[#allocation2 + $0x28] sm:$0xff]
          %v1575 = vld [vmem:[#allocation2 + $0x30] sm:$0xff]
          %v1576 = vld [vmem:[#allocation2 + $0x38] sm:$0xff]
          %v1577 = vld [vmem:[#allocation2 + $0x40] sm:$0xff]
          %v1578 = vld [vmem:[#allocation2 + $0x48] sm:$0xff]
          %v1579 = vld [vmem:[#allocation2 + $0x50] sm:$0xff]
          %v1580 = vld [vmem:[#allocation2 + $0x58] sm:$0xff]
          %v1581 = vld [vmem:[#allocation2 + $0x60] sm:$0xff]
          %v1582 = vld [vmem:[#allocation2 + $0x68] sm:$0xff]
          %v1583 = vld [vmem:[#allocation2 + $0x70] sm:$0xff]
          %v1584 = vld [vmem:[#allocation2 + $0x78] sm:$0xff]
          %v1585 = vld [vmem:[%s3] sm:$0x1]
          %v1587 = vlaneseq
          %v1588 = vshrl.u32 %v1587, 7
          %v1589 = vsub.s32 0, %v1588
          %v1590 = vrot.slane %v1585, %v1589
          %v1592 = vadd.f32 %v1569, %v1590
          %v1593 = vadd.f32 %v1570, %v1590
          %v1594 = vadd.f32 %v1571, %v1590
          %v1595 = vadd.f32 %v1572, %v1590
          %v1596 = vadd.f32 %v1573, %v1590
          %v1597 = vadd.f32 %v1574, %v1590
          %v1598 = vadd.f32 %v1575, %v1590
          %v1599 = vadd.f32 %v1576, %v1590
          %v1600 = vadd.f32 %v1577, %v1590
          %v1601 = vadd.f32 %v1578, %v1590
          %v1602 = vadd.f32 %v1579, %v1590
          %v1603 = vadd.f32 %v1580, %v1590
          %v1604 = vadd.f32 %v1581, %v1590
          %v1605 = vadd.f32 %v1582, %v1590
          %v1606 = vadd.f32 %v1583, %v1590
          %v1607 = vadd.f32 %v1584, %v1590
          %1608 = vst [vmem:[%s258] sm:$0xff] %v1592
          %1609 = vst [vmem:[%s258 + $0x8] sm:$0xff] %v1593
          %1610 = vst [vmem:[%s258 + $0x10] sm:$0xff] %v1594
          %1611 = vst [vmem:[%s258 + $0x18] sm:$0xff] %v1595
          %1612 = vst [vmem:[%s258 + $0x20] sm:$0xff] %v1596
          %1613 = vst [vmem:[%s258 + $0x28] sm:$0xff] %v1597
          %1614 = vst [vmem:[%s258 + $0x30] sm:$0xff] %v1598
          %1615 = vst [vmem:[%s258 + $0x38] sm:$0xff] %v1599
          %1616 = vst [vmem:[%s258 + $0x40] sm:$0xff] %v1600
          %1617 = vst [vmem:[%s258 + $0x48] sm:$0xff] %v1601
          %1618 = vst [vmem:[%s258 + $0x50] sm:$0xff] %v1602
          %1619 = vst [vmem:[%s258 + $0x58] sm:$0xff] %v1603
          %1620 = vst [vmem:[%s258 + $0x60] sm:$0xff] %v1604
          %1621 = vst [vmem:[%s258 + $0x68] sm:$0xff] %v1605
          %1622 = vst [vmem:[%s258 + $0x70] sm:$0xff] %v1606
          %1623 = vst [vmem:[%s258 + $0x78] sm:$0xff] %v1607
        $region48: #{graph_convolution.1} parent=35 // pred_fallthru
          _
        %s1624 = smul.u32 16, %s22
        %p1625 = scmp.lt.s32.totalorder %s1624, 79
        %s1626 = scalar_select %p1625, %s1624, 79
        %s1627 = smul.addr %s1626, 8
        %s1628 = scalar_lea.vmem %s4, %s1627
        // Predicated region
        $region49: #{graph_convolution.1} parent=35 // pred_check
          %p1629 = pneg %p144
        $region50: #{graph_convolution.1} parent=35 // pred_check_branch
          %1631 = sbr.rel (%p1629) target = $region52
        $region51: #{graph_convolution.1} parent=35 // pred_region
          %s1632 = smul.u32 16, %s22
        $region52: #{graph_convolution.1} parent=35 // pred_fallthru
          _
      $region36: #{graph_convolution.1} parent=5 // pred_fallthru
        _
      %p1633 = scmp.le.s32.totalorder 2, %s13
      // Predicated region
      $region53: #{graph_convolution.1} parent=5 // pred_check
        %p1634 = pneg %p1633
      $region54: #{graph_convolution.1} parent=5 // pred_check_branch
        %1636 = sbr.rel (%p1634) target = $region56
      $region55: #{graph_convolution.1} parent=5 // pred_region
        %s1637 = ssub.s32 %s13, 2
        // Predicated region
        $region57: #{graph_convolution.1} parent=55 // pred_check
          %p1638 = pneg %p150
        $region58: #{graph_convolution.1} parent=55 // pred_check_branch
          %1640 = sbr.rel (%p1638) target = $region60
        $region59: #{graph_convolution.1} parent=55 // pred_region
          %s1641 = smul.u32 16, %s24
          %p1642 = scmp.lt.s32.totalorder %s1641, 79
          %s1643 = scalar_select %p1642, %s1641, 79
          %s1644 = smul.addr %s1643, 8
          %s1645 = scalar_lea.vmem %s4, %s1644
        $region60: #{graph_convolution.1} parent=55 // pred_fallthru
          _
      $region56: #{graph_convolution.1} parent=5 // pred_fallthru
        _
    $region6: #{graph_convolution.1} parent=1 // loop_footer
      %s17 = sadd.s32 1, %s13
    $region7: #{graph_convolution.1} parent=1 // loop_footer_branch
      %12 = sbr.rel target = $region3
    $region8: #{graph_convolution.1} parent=1 // loop_exit
      _
    %1646 = vsyncpa [#allocation4], 1
    %s1647 = scalar_lea.sflag [#allocation4], 1
    %1648 = vsyncpa %s1647, 1

</llo_original>
